<compile_context>
chip_gen: v7x
topology: tpu7x:2x2x1
jax: 0.10.0
libtpu: 0.0.40
codegen_flags: <defaults>
</compile_context>

<pallas_src>
import jax
import jax.numpy as jnp
from jax.experimental import pallas as pl
from jax.experimental.pallas import tpu as pltpu

EPS = 1e-5


def se_basic_block_kernel(x_ref, w1_ref, wfc1_ref, bfc1_ref, wfc2_ref,
                          bfc2_ref, g1_ref, b1_ref, w2_ref, g2_ref, b2_ref,
                          o_ref, pad_ref):
    N, H, W, C = x_ref.shape
    M = N * H * W

    def im2col_conv(act4d, w_ref):
        """Write act4d (N,H,W,C f32) into the zero-bordered pad scratch, pull
        the nine 3x3 taps back as vreg values, concatenate them into one
        (M, 9C) bf16 operand and do a single MXU matmul against the (9C, C)
        bf16 weight.  No im2col VMEM round trip."""
        pad_ref[:, 1:H + 1, 1:W + 1, :] = act4d            # border stays zero
        taps = []
        for ky in range(3):
            for kx in range(3):
                tap = pad_ref[:, ky:ky + H, kx:kx + W, :]          # (N,H,W,C)
                taps.append(tap.reshape(M, C).astype(jnp.bfloat16))
        col = jnp.concatenate(taps, axis=-1)                       # (M,9C) bf16
        return jnp.dot(col, w_ref[...],
                       preferred_element_type=jnp.float32)         # (M,C) f32

    def bn_train(v, gamma, beta):
        """Two-pass training-mode BatchNorm on an (M, C) slab (biased var)."""
        mean = jnp.sum(v, axis=0, keepdims=True) * (1.0 / M)       # (1, C)
        d = v - mean
        var = jnp.sum(d * d, axis=0, keepdims=True) * (1.0 / M)    # (1, C)
        scale = gamma * jax.lax.rsqrt(var + EPS)
        return d * scale + beta

    # Zero only the four border strips of the pad scratch, once; both convs
    # overwrite the interior and reuse the same zero border.
    zrow = jnp.zeros((N, 1, W + 2, C), jnp.float32)
    pad_ref[:, 0:1, :, :] = zrow
    pad_ref[:, H + 1:H + 2, :, :] = zrow
    zcol = jnp.zeros((N, H + 2, 1, C), jnp.float32)
    pad_ref[:, :, 0:1, :] = zcol
    pad_ref[:, :, W + 1:W + 2, :] = zcol

    # ---- conv1: single im2col matmul, bf16 in / f32 acc --------------------
    c1 = im2col_conv(x_ref[...], w1_ref)                           # (M, C)

    # ---- SE: GAP -> fc -> ReLU -> fc -> sigmoid -> channel scale (VPU) -----
    c1n = c1.reshape(N, H * W, C)
    y = jnp.mean(c1n, axis=1)                                      # (N, C)
    z = jnp.maximum(
        jnp.sum(y[:, None, :] * wfc1_ref[...][None, :, :], axis=-1)
        + bfc1_ref[...], 0.0)                                      # (N, Cr)
    s = jax.nn.sigmoid(
        jnp.sum(z[:, :, None] * wfc2_ref[...][None, :, :], axis=1)
        + bfc2_ref[...])                                           # (N, C)
    se = (c1n * s[:, None, :]).reshape(M, C)

    # ---- bn1 + ReLU ----
    a1 = jnp.maximum(bn_train(se, g1_ref[...], b1_ref[...]), 0.0)  # (M, C)

    # ---- conv2 ----
    c2 = im2col_conv(a1.reshape(N, H, W, C), w2_ref)               # (M, C)

    # ---- bn2 + residual (x re-loaded from VMEM here, not pinned) + ReLU ----
    out = bn_train(c2, g2_ref[...], b2_ref[...]) + x_ref[...].reshape(M, C)
    o_ref[...] = jnp.maximum(out, 0.0).reshape(N, H, W, C)


def cifar_se_basic_block(x, params):
    N, H, W, C = x.shape
    M = N * H * W
    # Reshape conv weights to the im2col layout and cast to bf16 in the
    # wrapper (free in XLA; halves weight VMEM and feeds the bf16 MXU path).
    w1m = params["w1"].reshape(9 * C, C).astype(jnp.bfloat16)
    w2m = params["w2"].reshape(9 * C, C).astype(jnp.bfloat16)
    args = (x, w1m, params["w_fc1"], params["b_fc1"], params["w_fc2"],
            params["b_fc2"], params["gamma1"], params["beta1"],
            w2m, params["gamma2"], params["beta2"])
    vmem = lambda: pl.BlockSpec(memory_space=pltpu.MemorySpace.VMEM)

    flops = 2 * (2 * M * (9 * C) * C)                  # two conv matmuls
    transcendentals = N * C + 2 * C                    # sigmoid + rsqrt
    small = sum(int(params[k].size) * 4 for k in
                ("w_fc1", "b_fc1", "w_fc2", "b_fc2",
                 "gamma1", "beta1", "gamma2", "beta2"))
    bytes_accessed = 2 * x.size * 4 + (w1m.size + w2m.size) * 2 + small

    return pl.pallas_call(
        se_basic_block_kernel,
        out_shape=jax.ShapeDtypeStruct((N, H, W, C), jnp.float32),
        in_specs=[vmem() for _ in args],
        out_specs=vmem(),
        scratch_shapes=[
            pltpu.VMEM((N, H + 2, W + 2, C), jnp.float32),  # zero-bordered act
        ],
        compiler_params=pltpu.CompilerParams(
            vmem_limit_bytes=32 * 1024 * 1024),
        cost_estimate=pl.CostEstimate(
            flops=flops, transcendentals=transcendentals,
            bytes_accessed=bytes_accessed),
    )(*args)


def init_params(key, C, reduction=16):
    Cr = max(C // reduction, 1)
    k1, k2, k3, k4 = jax.random.split(key, 4)
    conv_std = (2.0 / (9 * C)) ** 0.5
    return {
        "w1": jax.random.normal(k1, (9, C, C), jnp.float32) * conv_std,
        "w2": jax.random.normal(k2, (9, C, C), jnp.float32) * conv_std,
        # nn.Linear layout: (out_features, in_features)
        "w_fc1": jax.random.normal(k3, (Cr, C), jnp.float32) * (1.0 / C) ** 0.5,
        "b_fc1": jnp.zeros((1, Cr), jnp.float32),
        # second fc stored as (in, out) = (Cr, C): s = z @ w_fc2 + b_fc2
        "w_fc2": jax.random.normal(k4, (Cr, C), jnp.float32) * (1.0 / Cr) ** 0.5,
        "b_fc2": jnp.zeros((1, C), jnp.float32),
        "gamma1": jnp.ones((1, C), jnp.float32),
        "beta1": jnp.zeros((1, C), jnp.float32),
        "gamma2": jnp.ones((1, C), jnp.float32),
        "beta2": jnp.zeros((1, C), jnp.float32),
    }


def ref_forward(x, p):
    """Pure-JAX f32 reference of the module's forward pass (same layouts)."""
    N, H, W, C = x.shape

    def conv(a, w9):
        w = w9.reshape(3, 3, C, C)                      # HWIO
        return jax.lax.conv_general_dilated(
            a, w, window_strides=(1, 1), padding="SAME",
            dimension_numbers=("NHWC", "HWIO", "NHWC"),
            precision=jax.lax.Precision.HIGHEST)

    def bn(a, g, b):
        m = jnp.mean(a, axis=(0, 1, 2))
        v = jnp.mean((a - m) ** 2, axis=(0, 1, 2))
        return g.reshape(-1) * (a - m) * jax.lax.rsqrt(v + EPS) + b.reshape(-1)

    out = conv(x, p["w1"])
    y = jnp.mean(out, axis=(1, 2))                                 # (N, C)
    z = jnp.maximum(y @ p["w_fc1"].T + p["b_fc1"], 0.0)            # (N, Cr)
    s = jax.nn.sigmoid(z @ p["w_fc2"] + p["b_fc2"])                # (N, C)
    out = out * s[:, None, None, :]
    out = jnp.maximum(bn(out, p["gamma1"], p["beta1"]), 0.0)
    out = conv(out, p["w2"])
    out = bn(out, p["gamma2"], p["beta2"]) + x
    return jnp.maximum(out, 0.0)


if __name__ == "__main__":
    key = jax.random.PRNGKey(0)
    kx, kp = jax.random.split(key)

    # inplanes == planes == cfg == 32 (required by the reference forward),
    # stride=1, downsample=None, reduction=16 -> SE hidden = 2.
    N, H, W, C = 2, 8, 8, 32
    x = jax.random.normal(kx, (N, H, W, C), jnp.float32)
    params = init_params(kp, C, reduction=16)

    out = jax.block_until_ready(cifar_se_basic_block(x, params))
    ref = jax.block_until_ready(ref_forward(x, params))

    assert out.shape == (N, H, W, C)
    assert bool(jnp.all(jnp.isfinite(out)))
    assert bool(jnp.all(out >= 0.0))                    # final ReLU
    max_err = float(jnp.max(jnp.abs(out - ref)))
    assert max_err < 1e-1, f"mismatch vs reference: max abs err {max_err}"
    print("KERNEL_OK")
</pallas_src>

<mosaic_0001>
module attributes {stable_mosaic.version = 11 : i64} {
  func.func @se_basic_block_kernel(%arg0: memref<2x8x8x32xf32, #tpu.memory_space<vmem>>, %arg1: memref<288x32xbf16, #tpu.memory_space<vmem>>, %arg2: memref<2x32xf32, #tpu.memory_space<vmem>>, %arg3: memref<1x2xf32, #tpu.memory_space<vmem>>, %arg4: memref<2x32xf32, #tpu.memory_space<vmem>>, %arg5: memref<1x32xf32, #tpu.memory_space<vmem>>, %arg6: memref<1x32xf32, #tpu.memory_space<vmem>>, %arg7: memref<1x32xf32, #tpu.memory_space<vmem>>, %arg8: memref<288x32xbf16, #tpu.memory_space<vmem>>, %arg9: memref<1x32xf32, #tpu.memory_space<vmem>>, %arg10: memref<1x32xf32, #tpu.memory_space<vmem>>, %arg11: memref<2x8x8x32xf32, #tpu.memory_space<vmem>>, %arg12: memref<2x10x10x32xf32, #tpu.memory_space<vmem>>) attributes {dimension_semantics = [], scalar_prefetch = 0 : i64, scratch_operands = 1 : i64, tpu.core_type = #tpu.core_type<tc>} {
    %cst = arith.constant 0.000000e+00 : f32
    %0 = vector.broadcast %cst : f32 to vector<2x1x10x32xf32>
    %c0 = arith.constant 0 : index
    %c0_0 = arith.constant 0 : index
    %c0_1 = arith.constant 0 : index
    %c0_2 = arith.constant 0 : index
    %1 = vector.load %arg12[%c0, %c0_0, %c0_1, %c0_2] : memref<2x10x10x32xf32, #tpu.memory_space<vmem>>, vector<2x1x10x32xf32>
    tpu.vector_store %arg12[%c0, %c0_0, %c0_1, %c0_2], %0 {strides = array<i32>} : memref<2x10x10x32xf32, #tpu.memory_space<vmem>>, vector<2x1x10x32xf32>,
    %c0_3 = arith.constant 0 : index
    %c9 = arith.constant 9 : index
    %c0_4 = arith.constant 0 : index
    %c0_5 = arith.constant 0 : index
    %2 = vector.load %arg12[%c0_3, %c9, %c0_4, %c0_5] : memref<2x10x10x32xf32, #tpu.memory_space<vmem>>, vector<2x1x10x32xf32>
    tpu.vector_store %arg12[%c0_3, %c9, %c0_4, %c0_5], %0 {strides = array<i32>} : memref<2x10x10x32xf32, #tpu.memory_space<vmem>>, vector<2x1x10x32xf32>,
    %cst_6 = arith.constant 0.000000e+00 : f32
    %3 = vector.broadcast %cst_6 : f32 to vector<2x10x1x32xf32>
    %c0_7 = arith.constant 0 : index
    %c0_8 = arith.constant 0 : index
    %c0_9 = arith.constant 0 : index
    %c0_10 = arith.constant 0 : index
    %4 = vector.load %arg12[%c0_7, %c0_8, %c0_9, %c0_10] : memref<2x10x10x32xf32, #tpu.memory_space<vmem>>, vector<2x10x1x32xf32>
    tpu.vector_store %arg12[%c0_7, %c0_8, %c0_9, %c0_10], %3 {strides = array<i32>} : memref<2x10x10x32xf32, #tpu.memory_space<vmem>>, vector<2x10x1x32xf32>,
    %c0_11 = arith.constant 0 : index
    %c0_12 = arith.constant 0 : index
    %c9_13 = arith.constant 9 : index
    %c0_14 = arith.constant 0 : index
    %5 = vector.load %arg12[%c0_11, %c0_12, %c9_13, %c0_14] : memref<2x10x10x32xf32, #tpu.memory_space<vmem>>, vector<2x10x1x32xf32>
    tpu.vector_store %arg12[%c0_11, %c0_12, %c9_13, %c0_14], %3 {strides = array<i32>} : memref<2x10x10x32xf32, #tpu.memory_space<vmem>>, vector<2x10x1x32xf32>,
    %c0_15 = arith.constant 0 : index
    %c0_16 = arith.constant 0 : index
    %c0_17 = arith.constant 0 : index
    %c0_18 = arith.constant 0 : index
    %6 = vector.load %arg0[%c0_15, %c0_16, %c0_17, %c0_18] : memref<2x8x8x32xf32, #tpu.memory_space<vmem>>, vector<2x8x8x32xf32>
    %c0_19 = arith.constant 0 : index
    %c1 = arith.constant 1 : index
    %c1_20 = arith.constant 1 : index
    %c0_21 = arith.constant 0 : index
    %7 = vector.load %arg12[%c0_19, %c1, %c1_20, %c0_21] : memref<2x10x10x32xf32, #tpu.memory_space<vmem>>, vector<2x8x8x32xf32>
    tpu.vector_store %arg12[%c0_19, %c1, %c1_20, %c0_21], %6 {strides = array<i32>} : memref<2x10x10x32xf32, #tpu.memory_space<vmem>>, vector<2x8x8x32xf32>,
    %c0_22 = arith.constant 0 : index
    %c0_23 = arith.constant 0 : index
    %c0_24 = arith.constant 0 : index
    %c0_25 = arith.constant 0 : index
    %8 = vector.load %arg12[%c0_22, %c0_23, %c0_24, %c0_25] : memref<2x10x10x32xf32, #tpu.memory_space<vmem>>, vector<2x8x8x32xf32>
    %9 = vector.shape_cast %8 : vector<2x8x8x32xf32> to vector<128x32xf32>
    %10 = arith.truncf %9 : vector<128x32xf32> to vector<128x32xbf16>
    %c0_26 = arith.constant 0 : index
    %c0_27 = arith.constant 0 : index
    %c1_28 = arith.constant 1 : index
    %c0_29 = arith.constant 0 : index
    %11 = vector.load %arg12[%c0_26, %c0_27, %c1_28, %c0_29] : memref<2x10x10x32xf32, #tpu.memory_space<vmem>>, vector<2x8x8x32xf32>
    %12 = vector.shape_cast %11 : vector<2x8x8x32xf32> to vector<128x32xf32>
    %13 = arith.truncf %12 : vector<128x32xf32> to vector<128x32xbf16>
    %c0_30 = arith.constant 0 : index
    %c0_31 = arith.constant 0 : index
    %c2 = arith.constant 2 : index
    %c0_32 = arith.constant 0 : index
    %14 = vector.load %arg12[%c0_30, %c0_31, %c2, %c0_32] : memref<2x10x10x32xf32, #tpu.memory_space<vmem>>, vector<2x8x8x32xf32>
    %15 = vector.shape_cast %14 : vector<2x8x8x32xf32> to vector<128x32xf32>
    %16 = arith.truncf %15 : vector<128x32xf32> to vector<128x32xbf16>
    %c0_33 = arith.constant 0 : index
    %c1_34 = arith.constant 1 : index
    %c0_35 = arith.constant 0 : index
    %c0_36 = arith.constant 0 : index
    %17 = vector.load %arg12[%c0_33, %c1_34, %c0_35, %c0_36] : memref<2x10x10x32xf32, #tpu.memory_space<vmem>>, vector<2x8x8x32xf32>
    %18 = vector.shape_cast %17 : vector<2x8x8x32xf32> to vector<128x32xf32>
    %19 = arith.truncf %18 : vector<128x32xf32> to vector<128x32xbf16>
    %c0_37 = arith.constant 0 : index
    %c1_38 = arith.constant 1 : index
    %c1_39 = arith.constant 1 : index
    %c0_40 = arith.constant 0 : index
    %20 = vector.load %arg12[%c0_37, %c1_38, %c1_39, %c0_40] : memref<2x10x10x32xf32, #tpu.memory_space<vmem>>, vector<2x8x8x32xf32>
    %21 = vector.shape_cast %20 : vector<2x8x8x32xf32> to vector<128x32xf32>
    %22 = arith.truncf %21 : vector<128x32xf32> to vector<128x32xbf16>
    %c0_41 = arith.constant 0 : index
    %c1_42 = arith.constant 1 : index
    %c2_43 = arith.constant 2 : index
    %c0_44 = arith.constant 0 : index
    %23 = vector.load %arg12[%c0_41, %c1_42, %c2_43, %c0_44] : memref<2x10x10x32xf32, #tpu.memory_space<vmem>>, vector<2x8x8x32xf32>
    %24 = vector.shape_cast %23 : vector<2x8x8x32xf32> to vector<128x32xf32>
    %25 = arith.truncf %24 : vector<128x32xf32> to vector<128x32xbf16>
    %c0_45 = arith.constant 0 : index
    %c2_46 = arith.constant 2 : index
    %c0_47 = arith.constant 0 : index
    %c0_48 = arith.constant 0 : index
    %26 = vector.load %arg12[%c0_45, %c2_46, %c0_47, %c0_48] : memref<2x10x10x32xf32, #tpu.memory_space<vmem>>, vector<2x8x8x32xf32>
    %27 = vector.shape_cast %26 : vector<2x8x8x32xf32> to vector<128x32xf32>
    %28 = arith.truncf %27 : vector<128x32xf32> to vector<128x32xbf16>
    %c0_49 = arith.constant 0 : index
    %c2_50 = arith.constant 2 : index
    %c1_51 = arith.constant 1 : index
    %c0_52 = arith.constant 0 : index
    %29 = vector.load %arg12[%c0_49, %c2_50, %c1_51, %c0_52] : memref<2x10x10x32xf32, #tpu.memory_space<vmem>>, vector<2x8x8x32xf32>
    %30 = vector.shape_cast %29 : vector<2x8x8x32xf32> to vector<128x32xf32>
    %31 = arith.truncf %30 : vector<128x32xf32> to vector<128x32xbf16>
    %c0_53 = arith.constant 0 : index
    %c2_54 = arith.constant 2 : index
    %c2_55 = arith.constant 2 : index
    %c0_56 = arith.constant 0 : index
    %32 = vector.load %arg12[%c0_53, %c2_54, %c2_55, %c0_56] : memref<2x10x10x32xf32, #tpu.memory_space<vmem>>, vector<2x8x8x32xf32>
    %33 = vector.shape_cast %32 : vector<2x8x8x32xf32> to vector<128x32xf32>
    %34 = arith.truncf %33 : vector<128x32xf32> to vector<128x32xbf16>
    %35 = tpu.concatenate %10, %13, %16, %19, %22, %25, %28, %31, %34 in 1 : vector<128x32xbf16>, vector<128x32xbf16>, vector<128x32xbf16>, vector<128x32xbf16>, vector<128x32xbf16>, vector<128x32xbf16>, vector<128x32xbf16>, vector<128x32xbf16>, vector<128x32xbf16> -> vector<128x288xbf16>
    %c0_57 = arith.constant 0 : index
    %c0_58 = arith.constant 0 : index
    %36 = vector.load %arg1[%c0_57, %c0_58] : memref<288x32xbf16, #tpu.memory_space<vmem>>, vector<288x32xbf16>
    %cst_59 = arith.constant dense<0.000000e+00> : vector<128x32xf32>
    %37 = tpu.matmul %35, %36, %cst_59 {dimension_numbers = #tpu.dot_dimension_numbers<[1], [0], [0], [1], [0, 0, 1, 1], [], []>} : vector<128x288xbf16>, vector<288x32xbf16>, vector<128x32xf32> -> vector<128x32xf32>
    %38 = vector.shape_cast %37 : vector<128x32xf32> to vector<2x64x32xf32>
    %cst_60 = arith.constant dense<0.000000e+00> : vector<2x32xf32>
    %39 = vector.multi_reduction <add>, %38, %cst_60 [1] : vector<2x64x32xf32> to vector<2x32xf32>
    %cst_61 = arith.constant 6.400000e+01 : f32
    %40 = vector.broadcast %cst_61 : f32 to vector<2x32xf32>
    %41 = arith.divf %39, %40 : vector<2x32xf32>
    %42 = vector.shape_cast %41 : vector<2x32xf32> to vector<2x1x32xf32>
    %c0_62 = arith.constant 0 : index
    %c0_63 = arith.constant 0 : index
    %43 = vector.load %arg2[%c0_62, %c0_63] : memref<2x32xf32, #tpu.memory_space<vmem>>, vector<2x32xf32>
    %44 = vector.shape_cast %43 : vector<2x32xf32> to vector<1x2x32xf32>
    %45 = vector.broadcast %42 : vector<2x1x32xf32> to vector<2x2x32xf32>
    %46 = vector.broadcast %44 : vector<1x2x32xf32> to vector<2x2x32xf32>
    %47 = arith.mulf %45, %46 : vector<2x2x32xf32>
    %cst_64 = arith.constant dense<0.000000e+00> : vector<2x2xf32>
    %48 = vector.multi_reduction <add>, %47, %cst_64 [2] : vector<2x2x32xf32> to vector<2x2xf32>
    %c0_65 = arith.constant 0 : index
    %c0_66 = arith.constant 0 : index
    %49 = vector.load %arg3[%c0_65, %c0_66] : memref<1x2xf32, #tpu.memory_space<vmem>>, vector<1x2xf32>
    %50 = vector.broadcast %49 : vector<1x2xf32> to vector<2x2xf32>
    %51 = arith.addf %48, %50 : vector<2x2xf32>
    %cst_67 = arith.constant 0.000000e+00 : f32
    %52 = vector.broadcast %cst_67 : f32 to vector<2x2xf32>
    %53 = arith.maximumf %51, %52 : vector<2x2xf32>
    %54 = vector.shape_cast %53 : vector<2x2xf32> to vector<2x2x1xf32>
    %c0_68 = arith.constant 0 : index
    %c0_69 = arith.constant 0 : index
    %55 = vector.load %arg4[%c0_68, %c0_69] : memref<2x32xf32, #tpu.memory_space<vmem>>, vector<2x32xf32>
    %56 = vector.shape_cast %55 : vector<2x32xf32> to vector<1x2x32xf32>
    %57 = vector.broadcast %54 : vector<2x2x1xf32> to vector<2x2x32xf32>
    %58 = vector.broadcast %56 : vector<1x2x32xf32> to vector<2x2x32xf32>
    %59 = arith.mulf %57, %58 : vector<2x2x32xf32>
    %cst_70 = arith.constant dense<0.000000e+00> : vector<2x32xf32>
    %60 = vector.multi_reduction <add>, %59, %cst_70 [1] : vector<2x2x32xf32> to vector<2x32xf32>
    %c0_71 = arith.constant 0 : index
    %c0_72 = arith.constant 0 : index
    %61 = vector.load %arg5[%c0_71, %c0_72] : memref<1x32xf32, #tpu.memory_space<vmem>>, vector<1x32xf32>
    %62 = vector.broadcast %61 : vector<1x32xf32> to vector<2x32xf32>
    %63 = arith.addf %60, %62 : vector<2x32xf32>
    %64 = arith.negf %63 : vector<2x32xf32>
    %65 = math.exp %64 : vector<2x32xf32>
    %cst_73 = arith.constant 1.000000e+00 : f32
    %66 = vector.broadcast %cst_73 : f32 to vector<2x32xf32>
    %67 = arith.addf %66, %65 : vector<2x32xf32>
    %68 = arith.divf %66, %67 : vector<2x32xf32>
    %69 = vector.shape_cast %68 : vector<2x32xf32> to vector<2x1x32xf32>
    %70 = vector.broadcast %69 : vector<2x1x32xf32> to vector<2x64x32xf32>
    %71 = arith.mulf %38, %70 : vector<2x64x32xf32>
    %72 = vector.shape_cast %71 : vector<2x64x32xf32> to vector<128x32xf32>
    %c0_74 = arith.constant 0 : index
    %c0_75 = arith.constant 0 : index
    %73 = vector.load %arg6[%c0_74, %c0_75] : memref<1x32xf32, #tpu.memory_space<vmem>>, vector<1x32xf32>
    %c0_76 = arith.constant 0 : index
    %c0_77 = arith.constant 0 : index
    %74 = vector.load %arg7[%c0_76, %c0_77] : memref<1x32xf32, #tpu.memory_space<vmem>>, vector<1x32xf32>
    %cst_78 = arith.constant dense<0.000000e+00> : vector<32xf32>
    %75 = vector.multi_reduction <add>, %72, %cst_78 [0] : vector<128x32xf32> to vector<32xf32>
    %76 = vector.shape_cast %75 : vector<32xf32> to vector<1x32xf32>
    %cst_79 = arith.constant 7.812500e-03 : f32
    %77 = vector.broadcast %cst_79 : f32 to vector<1x32xf32>
    %78 = arith.mulf %76, %77 : vector<1x32xf32>
    %79 = vector.broadcast %78 : vector<1x32xf32> to vector<128x32xf32>
    %80 = arith.subf %72, %79 : vector<128x32xf32>
    %81 = arith.mulf %80, %80 : vector<128x32xf32>
    %cst_80 = arith.constant dense<0.000000e+00> : vector<32xf32>
    %82 = vector.multi_reduction <add>, %81, %cst_80 [0] : vector<128x32xf32> to vector<32xf32>
    %83 = vector.shape_cast %82 : vector<32xf32> to vector<1x32xf32>
    %cst_81 = arith.constant 7.812500e-03 : f32
    %84 = vector.broadcast %cst_81 : f32 to vector<1x32xf32>
    %85 = arith.mulf %83, %84 : vector<1x32xf32>
    %cst_82 = arith.constant 9.99999974E-6 : f32
    %86 = vector.broadcast %cst_82 : f32 to vector<1x32xf32>
    %87 = arith.addf %85, %86 : vector<1x32xf32>
    %88 = math.rsqrt %87 : vector<1x32xf32>
    %89 = arith.mulf %73, %88 : vector<1x32xf32>
    %90 = vector.broadcast %89 : vector<1x32xf32> to vector<128x32xf32>
    %91 = arith.mulf %80, %90 : vector<128x32xf32>
    %92 = vector.broadcast %74 : vector<1x32xf32> to vector<128x32xf32>
    %93 = arith.addf %91, %92 : vector<128x32xf32>
    %cst_83 = arith.constant 0.000000e+00 : f32
    %94 = vector.broadcast %cst_83 : f32 to vector<128x32xf32>
    %95 = arith.maximumf %93, %94 : vector<128x32xf32>
    %96 = vector.shape_cast %95 : vector<128x32xf32> to vector<2x8x8x32xf32>
    %c0_84 = arith.constant 0 : index
    %c1_85 = arith.constant 1 : index
    %c1_86 = arith.constant 1 : index
    %c0_87 = arith.constant 0 : index
    %97 = vector.load %arg12[%c0_84, %c1_85, %c1_86, %c0_87] : memref<2x10x10x32xf32, #tpu.memory_space<vmem>>, vector<2x8x8x32xf32>
    tpu.vector_store %arg12[%c0_84, %c1_85, %c1_86, %c0_87], %96 {strides = array<i32>} : memref<2x10x10x32xf32, #tpu.memory_space<vmem>>, vector<2x8x8x32xf32>,
    %c0_88 = arith.constant 0 : index
    %c0_89 = arith.constant 0 : index
    %c0_90 = arith.constant 0 : index
    %c0_91 = arith.constant 0 : index
    %98 = vector.load %arg12[%c0_88, %c0_89, %c0_90, %c0_91] : memref<2x10x10x32xf32, #tpu.memory_space<vmem>>, vector<2x8x8x32xf32>
    %99 = vector.shape_cast %98 : vector<2x8x8x32xf32> to vector<128x32xf32>
    %100 = arith.truncf %99 : vector<128x32xf32> to vector<128x32xbf16>
    %c0_92 = arith.constant 0 : index
    %c0_93 = arith.constant 0 : index
    %c1_94 = arith.constant 1 : index
    %c0_95 = arith.constant 0 : index
    %101 = vector.load %arg12[%c0_92, %c0_93, %c1_94, %c0_95] : memref<2x10x10x32xf32, #tpu.memory_space<vmem>>, vector<2x8x8x32xf32>
    %102 = vector.shape_cast %101 : vector<2x8x8x32xf32> to vector<128x32xf32>
    %103 = arith.truncf %102 : vector<128x32xf32> to vector<128x32xbf16>
    %c0_96 = arith.constant 0 : index
    %c0_97 = arith.constant 0 : index
    %c2_98 = arith.constant 2 : index
    %c0_99 = arith.constant 0 : index
    %104 = vector.load %arg12[%c0_96, %c0_97, %c2_98, %c0_99] : memref<2x10x10x32xf32, #tpu.memory_space<vmem>>, vector<2x8x8x32xf32>
    %105 = vector.shape_cast %104 : vector<2x8x8x32xf32> to vector<128x32xf32>
    %106 = arith.truncf %105 : vector<128x32xf32> to vector<128x32xbf16>
    %c0_100 = arith.constant 0 : index
    %c1_101 = arith.constant 1 : index
    %c0_102 = arith.constant 0 : index
    %c0_103 = arith.constant 0 : index
    %107 = vector.load %arg12[%c0_100, %c1_101, %c0_102, %c0_103] : memref<2x10x10x32xf32, #tpu.memory_space<vmem>>, vector<2x8x8x32xf32>
    %108 = vector.shape_cast %107 : vector<2x8x8x32xf32> to vector<128x32xf32>
    %109 = arith.truncf %108 : vector<128x32xf32> to vector<128x32xbf16>
    %c0_104 = arith.constant 0 : index
    %c1_105 = arith.constant 1 : index
    %c1_106 = arith.constant 1 : index
    %c0_107 = arith.constant 0 : index
    %110 = vector.load %arg12[%c0_104, %c1_105, %c1_106, %c0_107] : memref<2x10x10x32xf32, #tpu.memory_space<vmem>>, vector<2x8x8x32xf32>
    %111 = vector.shape_cast %110 : vector<2x8x8x32xf32> to vector<128x32xf32>
    %112 = arith.truncf %111 : vector<128x32xf32> to vector<128x32xbf16>
    %c0_108 = arith.constant 0 : index
    %c1_109 = arith.constant 1 : index
    %c2_110 = arith.constant 2 : index
    %c0_111 = arith.constant 0 : index
    %113 = vector.load %arg12[%c0_108, %c1_109, %c2_110, %c0_111] : memref<2x10x10x32xf32, #tpu.memory_space<vmem>>, vector<2x8x8x32xf32>
    %114 = vector.shape_cast %113 : vector<2x8x8x32xf32> to vector<128x32xf32>
    %115 = arith.truncf %114 : vector<128x32xf32> to vector<128x32xbf16>
    %c0_112 = arith.constant 0 : index
    %c2_113 = arith.constant 2 : index
    %c0_114 = arith.constant 0 : index
    %c0_115 = arith.constant 0 : index
    %116 = vector.load %arg12[%c0_112, %c2_113, %c0_114, %c0_115] : memref<2x10x10x32xf32, #tpu.memory_space<vmem>>, vector<2x8x8x32xf32>
    %117 = vector.shape_cast %116 : vector<2x8x8x32xf32> to vector<128x32xf32>
    %118 = arith.truncf %117 : vector<128x32xf32> to vector<128x32xbf16>
    %c0_116 = arith.constant 0 : index
    %c2_117 = arith.constant 2 : index
    %c1_118 = arith.constant 1 : index
    %c0_119 = arith.constant 0 : index
    %119 = vector.load %arg12[%c0_116, %c2_117, %c1_118, %c0_119] : memref<2x10x10x32xf32, #tpu.memory_space<vmem>>, vector<2x8x8x32xf32>
    %120 = vector.shape_cast %119 : vector<2x8x8x32xf32> to vector<128x32xf32>
    %121 = arith.truncf %120 : vector<128x32xf32> to vector<128x32xbf16>
    %c0_120 = arith.constant 0 : index
    %c2_121 = arith.constant 2 : index
    %c2_122 = arith.constant 2 : index
    %c0_123 = arith.constant 0 : index
    %122 = vector.load %arg12[%c0_120, %c2_121, %c2_122, %c0_123] : memref<2x10x10x32xf32, #tpu.memory_space<vmem>>, vector<2x8x8x32xf32>
    %123 = vector.shape_cast %122 : vector<2x8x8x32xf32> to vector<128x32xf32>
    %124 = arith.truncf %123 : vector<128x32xf32> to vector<128x32xbf16>
    %125 = tpu.concatenate %100, %103, %106, %109, %112, %115, %118, %121, %124 in 1 : vector<128x32xbf16>, vector<128x32xbf16>, vector<128x32xbf16>, vector<128x32xbf16>, vector<128x32xbf16>, vector<128x32xbf16>, vector<128x32xbf16>, vector<128x32xbf16>, vector<128x32xbf16> -> vector<128x288xbf16>
    %c0_124 = arith.constant 0 : index
    %c0_125 = arith.constant 0 : index
    %126 = vector.load %arg8[%c0_124, %c0_125] : memref<288x32xbf16, #tpu.memory_space<vmem>>, vector<288x32xbf16>
    %cst_126 = arith.constant dense<0.000000e+00> : vector<128x32xf32>
    %127 = tpu.matmul %125, %126, %cst_126 {dimension_numbers = #tpu.dot_dimension_numbers<[1], [0], [0], [1], [0, 0, 1, 1], [], []>} : vector<128x288xbf16>, vector<288x32xbf16>, vector<128x32xf32> -> vector<128x32xf32>
    %c0_127 = arith.constant 0 : index
    %c0_128 = arith.constant 0 : index
    %128 = vector.load %arg9[%c0_127, %c0_128] : memref<1x32xf32, #tpu.memory_space<vmem>>, vector<1x32xf32>
    %c0_129 = arith.constant 0 : index
    %c0_130 = arith.constant 0 : index
    %129 = vector.load %arg10[%c0_129, %c0_130] : memref<1x32xf32, #tpu.memory_space<vmem>>, vector<1x32xf32>
    %cst_131 = arith.constant dense<0.000000e+00> : vector<32xf32>
    %130 = vector.multi_reduction <add>, %127, %cst_131 [0] : vector<128x32xf32> to vector<32xf32>
    %131 = vector.shape_cast %130 : vector<32xf32> to vector<1x32xf32>
    %cst_132 = arith.constant 7.812500e-03 : f32
    %132 = vector.broadcast %cst_132 : f32 to vector<1x32xf32>
    %133 = arith.mulf %131, %132 : vector<1x32xf32>
    %134 = vector.broadcast %133 : vector<1x32xf32> to vector<128x32xf32>
    %135 = arith.subf %127, %134 : vector<128x32xf32>
    %136 = arith.mulf %135, %135 : vector<128x32xf32>
    %cst_133 = arith.constant dense<0.000000e+00> : vector<32xf32>
    %137 = vector.multi_reduction <add>, %136, %cst_133 [0] : vector<128x32xf32> to vector<32xf32>
    %138 = vector.shape_cast %137 : vector<32xf32> to vector<1x32xf32>
    %cst_134 = arith.constant 7.812500e-03 : f32
    %139 = vector.broadcast %cst_134 : f32 to vector<1x32xf32>
    %140 = arith.mulf %138, %139 : vector<1x32xf32>
    %cst_135 = arith.constant 9.99999974E-6 : f32
    %141 = vector.broadcast %cst_135 : f32 to vector<1x32xf32>
    %142 = arith.addf %140, %141 : vector<1x32xf32>
    %143 = math.rsqrt %142 : vector<1x32xf32>
    %144 = arith.mulf %128, %143 : vector<1x32xf32>
    %145 = vector.broadcast %144 : vector<1x32xf32> to vector<128x32xf32>
    %146 = arith.mulf %135, %145 : vector<128x32xf32>
    %147 = vector.broadcast %129 : vector<1x32xf32> to vector<128x32xf32>
    %148 = arith.addf %146, %147 : vector<128x32xf32>
    %c0_136 = arith.constant 0 : index
    %c0_137 = arith.constant 0 : index
    %c0_138 = arith.constant 0 : index
    %c0_139 = arith.constant 0 : index
    %149 = vector.load %arg0[%c0_136, %c0_137, %c0_138, %c0_139] : memref<2x8x8x32xf32, #tpu.memory_space<vmem>>, vector<2x8x8x32xf32>
    %150 = vector.shape_cast %149 : vector<2x8x8x32xf32> to vector<128x32xf32>
    %151 = arith.addf %148, %150 : vector<128x32xf32>
    %cst_140 = arith.constant 0.000000e+00 : f32
    %152 = vector.broadcast %cst_140 : f32 to vector<128x32xf32>
    %153 = arith.maximumf %151, %152 : vector<128x32xf32>
    %154 = vector.shape_cast %153 : vector<128x32xf32> to vector<2x8x8x32xf32>
    %c0_141 = arith.constant 0 : index
    %c0_142 = arith.constant 0 : index
    %c0_143 = arith.constant 0 : index
    %c0_144 = arith.constant 0 : index
    %155 = vector.load %arg11[%c0_141, %c0_142, %c0_143, %c0_144] : memref<2x8x8x32xf32, #tpu.memory_space<vmem>>, vector<2x8x8x32xf32>
    tpu.vector_store %arg11[%c0_141, %c0_142, %c0_143, %c0_144], %154 {strides = array<i32>} : memref<2x8x8x32xf32, #tpu.memory_space<vmem>>, vector<2x8x8x32xf32>,
    return
  }
}

</mosaic_0001>

<llo_original>
// kernel: tpu_custom_call.1
$region0: #{tpu_custom_call.1}
  #allocation0 [shape = 'u32[]', space=smem, size = 0x4, offset = 0x4, fixed_abs, tag = 'smem constant byte address 0x4 - core index']
  #allocation1 [shape = 'u32[144,128]{1,0:T(1,128)}', space=vmem, size = 0x12000, scoped, tag = 'internal scratch']
  #allocation2 [shape = 'f32[2,10,10,32]{3,2,1,0:T(8,128)}', space=vmem, size = 0x28000, scoped, tag = 'scratch operand']
  %s0 = inlined_call_operand.vmem [shape: f32[2,8,8,32], index: 0, kind: input, shape index: {}]
  %s1 = inlined_call_operand.vmem [shape: bf16[288,32], index: 1, kind: input, shape index: {}]
  %s2 = inlined_call_operand.vmem [shape: f32[2,32], index: 2, kind: input, shape index: {}]
  %s3 = inlined_call_operand.vmem [shape: f32[1,2], index: 3, kind: input, shape index: {}]
  %s4 = inlined_call_operand.vmem [shape: f32[2,32], index: 4, kind: input, shape index: {}]
  %s5 = inlined_call_operand.vmem [shape: f32[1,32], index: 5, kind: input, shape index: {}]
  %s6 = inlined_call_operand.vmem [shape: f32[1,32], index: 6, kind: input, shape index: {}]
  %s7 = inlined_call_operand.vmem [shape: f32[1,32], index: 7, kind: input, shape index: {}]
  %s8 = inlined_call_operand.vmem [shape: bf16[288,32], index: 8, kind: input, shape index: {}]
  %s9 = inlined_call_operand.vmem [shape: f32[1,32], index: 9, kind: input, shape index: {}]
  %s10 = inlined_call_operand.vmem [shape: f32[1,32], index: 10, kind: input, shape index: {}]
  %s11 = inlined_call_operand.hbm [shape: f32[2,8,8,32], index: 11, kind: output, shape index: {}]
  %s12 = sld [smem:[#allocation0]]
  $region54: #{tpu_custom_call.1} parent=0
    _
  %s14 = ssub.s32 1, %s12
  %s15 = scalar_select 0, %s14, %s12
  $region1: #{tpu_custom_call.1} parent=0
    #allocation3 [shape = 'u8[65536]{0}', space=vmem, size = 0x10000, scoped, tag = 'output window, operand 0, single buffered']
    #allocation4 [shape = 's32[1]{0}', space=sflag, size = 0x4, scoped, tag = 'scoped memory for tpu_custom_call.1']
    %16 = vsyncpa [#allocation4], 0
    // Predicated region
    $region2: #{tpu_custom_call.1} parent=1 // pred_check
      _
    $region3: #{tpu_custom_call.1} parent=1 // pred_check_branch
      %18 = sbr.rel (0) target = $region5
    $region4: #{tpu_custom_call.1} parent=1 // pred_region
      _
    $region5: #{tpu_custom_call.1} parent=1 // pred_fallthru
      _
    // Predicated region
    $region6: #{tpu_custom_call.1} parent=1 // pred_check
      _
    $region7: #{tpu_custom_call.1} parent=1 // pred_check_branch
      %20 = sbr.rel (0) target = $region9
    $region8: #{tpu_custom_call.1} parent=1 // pred_region
      _
    $region9: #{tpu_custom_call.1} parent=1 // pred_fallthru
      _
    // Predicated region
    $region10: #{tpu_custom_call.1} parent=1 // pred_check
      _
    $region11: #{tpu_custom_call.1} parent=1 // pred_check_branch
      %22 = sbr.rel (0) target = $region13
    $region12: #{tpu_custom_call.1} parent=1 // pred_region
      _
    $region13: #{tpu_custom_call.1} parent=1 // pred_fallthru
      _
    // Predicated region
    $region14: #{tpu_custom_call.1} parent=1 // pred_check
      _
    $region15: #{tpu_custom_call.1} parent=1 // pred_check_branch
      %24 = sbr.rel (0) target = $region17
    $region16: #{tpu_custom_call.1} parent=1 // pred_region
      _
    $region17: #{tpu_custom_call.1} parent=1 // pred_fallthru
      _
    // Predicated region
    $region18: #{tpu_custom_call.1} parent=1 // pred_check
      _
    $region19: #{tpu_custom_call.1} parent=1 // pred_check_branch
      %26 = sbr.rel (0) target = $region21
    $region20: #{tpu_custom_call.1} parent=1 // pred_region
      _
    $region21: #{tpu_custom_call.1} parent=1 // pred_fallthru
      _
    // Predicated region
    $region22: #{tpu_custom_call.1} parent=1 // pred_check
      _
    $region23: #{tpu_custom_call.1} parent=1 // pred_check_branch
      %28 = sbr.rel (0) target = $region25
    $region24: #{tpu_custom_call.1} parent=1 // pred_region
      _
    $region25: #{tpu_custom_call.1} parent=1 // pred_fallthru
      _
    // Predicated region
    $region26: #{tpu_custom_call.1} parent=1 // pred_check
      _
    $region27: #{tpu_custom_call.1} parent=1 // pred_check_branch
      %30 = sbr.rel (0) target = $region29
    $region28: #{tpu_custom_call.1} parent=1 // pred_region
      _
    $region29: #{tpu_custom_call.1} parent=1 // pred_fallthru
      _
    // Predicated region
    $region30: #{tpu_custom_call.1} parent=1 // pred_check
      _
    $region31: #{tpu_custom_call.1} parent=1 // pred_check_branch
      %32 = sbr.rel (0) target = $region33
    $region32: #{tpu_custom_call.1} parent=1 // pred_region
      _
    $region33: #{tpu_custom_call.1} parent=1 // pred_fallthru
      _
    // Predicated region
    $region34: #{tpu_custom_call.1} parent=1 // pred_check
      _
    $region35: #{tpu_custom_call.1} parent=1 // pred_check_branch
      %34 = sbr.rel (0) target = $region37
    $region36: #{tpu_custom_call.1} parent=1 // pred_region
      _
    $region37: #{tpu_custom_call.1} parent=1 // pred_fallthru
      _
    // Predicated region
    $region38: #{tpu_custom_call.1} parent=1 // pred_check
      _
    $region39: #{tpu_custom_call.1} parent=1 // pred_check_branch
      %36 = sbr.rel (0) target = $region41
    $region40: #{tpu_custom_call.1} parent=1 // pred_region
      _
    $region41: #{tpu_custom_call.1} parent=1 // pred_fallthru
      _
    // Predicated region
    $region42: #{tpu_custom_call.1} parent=1 // pred_check
      _
    $region43: #{tpu_custom_call.1} parent=1 // pred_check_branch
      %38 = sbr.rel (0) target = $region45
    $region44: #{tpu_custom_call.1} parent=1 // pred_region
      _
    $region45: #{tpu_custom_call.1} parent=1 // pred_fallthru
      _
    %vm40 = vcmask 261120
    %41 = vst.msk [vmem:[#allocation2] sm:$0xff] %vm40, 0.0
    %vm42 = vcmask 254976
    %43 = vst.msk [vmem:[#allocation2 + $0x8] sm:$0x3] %vm42, 0.0
    %44 = vst.msk [vmem:[#allocation2 + $0xa0] sm:$0xff] %vm40, 0.0
    %45 = vst.msk [vmem:[#allocation2 + $0xa8] sm:$0x3] %vm42, 0.0
    %s46 = scalar_lea.vmem [#allocation2], 144
    %47 = vst.msk [vmem:[%s46] sm:$0xff] %vm40, 0.0
    %48 = vst.msk [vmem:[%s46 + $0x8] sm:$0x3] %vm42, 0.0
    %49 = vst.msk [vmem:[%s46 + $0xa0] sm:$0xff] %vm40, 0.0
    %50 = vst.msk [vmem:[%s46 + $0xa8] sm:$0x3] %vm42, 0.0
    %vm51 = vcmask 253952
    %52 = vst.msk [vmem:[#allocation2] sm:$0x1] %vm51, 0.0
    %53 = vst.msk [vmem:[#allocation2 + $0x10] sm:$0x1] %vm51, 0.0
    %54 = vst.msk [vmem:[#allocation2 + $0x20] sm:$0x1] %vm51, 0.0
    %55 = vst.msk [vmem:[#allocation2 + $0x30] sm:$0x1] %vm51, 0.0
    %56 = vst.msk [vmem:[#allocation2 + $0x40] sm:$0x1] %vm51, 0.0
    %57 = vst.msk [vmem:[#allocation2 + $0x50] sm:$0x1] %vm51, 0.0
    %58 = vst.msk [vmem:[#allocation2 + $0x60] sm:$0x1] %vm51, 0.0
    %59 = vst.msk [vmem:[#allocation2 + $0x70] sm:$0x1] %vm51, 0.0
    %60 = vst.msk [vmem:[#allocation2 + $0x80] sm:$0x1] %vm51, 0.0
    %61 = vst.msk [vmem:[#allocation2 + $0x90] sm:$0x1] %vm51, 0.0
    %62 = vst.msk [vmem:[#allocation2 + $0xa0] sm:$0x1] %vm51, 0.0
    %63 = vst.msk [vmem:[#allocation2 + $0xb0] sm:$0x1] %vm51, 0.0
    %64 = vst.msk [vmem:[#allocation2 + $0xc0] sm:$0x1] %vm51, 0.0
    %65 = vst.msk [vmem:[#allocation2 + $0xd0] sm:$0x1] %vm51, 0.0
    %66 = vst.msk [vmem:[#allocation2 + $0xe0] sm:$0x1] %vm51, 0.0
    %67 = vst.msk [vmem:[#allocation2 + $0xf0] sm:$0x1] %vm51, 0.0
    %68 = vst.msk [vmem:[#allocation2 + $0x100] sm:$0x1] %vm51, 0.0
    %69 = vst.msk [vmem:[#allocation2 + $0x110] sm:$0x1] %vm51, 0.0
    %70 = vst.msk [vmem:[#allocation2 + $0x120] sm:$0x1] %vm51, 0.0
    %71 = vst.msk [vmem:[#allocation2 + $0x130] sm:$0x1] %vm51, 0.0
    %72 = vst.msk [vmem:[#allocation2 + $0x9] sm:$0x1] %vm51, 0.0
    %73 = vst.msk [vmem:[#allocation2 + $0x19] sm:$0x1] %vm51, 0.0
    %74 = vst.msk [vmem:[#allocation2 + $0x29] sm:$0x1] %vm51, 0.0
    %75 = vst.msk [vmem:[#allocation2 + $0x39] sm:$0x1] %vm51, 0.0
    %76 = vst.msk [vmem:[#allocation2 + $0x49] sm:$0x1] %vm51, 0.0
    %77 = vst.msk [vmem:[#allocation2 + $0x59] sm:$0x1] %vm51, 0.0
    %78 = vst.msk [vmem:[#allocation2 + $0x69] sm:$0x1] %vm51, 0.0
    %79 = vst.msk [vmem:[#allocation2 + $0x79] sm:$0x1] %vm51, 0.0
    %80 = vst.msk [vmem:[#allocation2 + $0x89] sm:$0x1] %vm51, 0.0
    %81 = vst.msk [vmem:[#allocation2 + $0x99] sm:$0x1] %vm51, 0.0
    %82 = vst.msk [vmem:[#allocation2 + $0xa9] sm:$0x1] %vm51, 0.0
    %83 = vst.msk [vmem:[#allocation2 + $0xb9] sm:$0x1] %vm51, 0.0
    %84 = vst.msk [vmem:[#allocation2 + $0xc9] sm:$0x1] %vm51, 0.0
    %85 = vst.msk [vmem:[#allocation2 + $0xd9] sm:$0x1] %vm51, 0.0
    %86 = vst.msk [vmem:[#allocation2 + $0xe9] sm:$0x1] %vm51, 0.0
    %87 = vst.msk [vmem:[#allocation2 + $0xf9] sm:$0x1] %vm51, 0.0
    %88 = vst.msk [vmem:[#allocation2 + $0x109] sm:$0x1] %vm51, 0.0
    %89 = vst.msk [vmem:[#allocation2 + $0x119] sm:$0x1] %vm51, 0.0
    %90 = vst.msk [vmem:[#allocation2 + $0x129] sm:$0x1] %vm51, 0.0
    %91 = vst.msk [vmem:[#allocation2 + $0x139] sm:$0x1] %vm51, 0.0
    %v92 = vld [vmem:[%s0] sm:$0xff]
    %v93 = vld [vmem:[%s0 + $0x8] sm:$0xff]
    %v94 = vld [vmem:[%s0 + $0x10] sm:$0xff]
    %v95 = vld [vmem:[%s0 + $0x18] sm:$0xff]
    %v96 = vld [vmem:[%s0 + $0x20] sm:$0xff]
    %v97 = vld [vmem:[%s0 + $0x28] sm:$0xff]
    %v98 = vld [vmem:[%s0 + $0x30] sm:$0xff]
    %v99 = vld [vmem:[%s0 + $0x38] sm:$0xff]
    %v100 = vld [vmem:[%s0 + $0x40] sm:$0xff]
    %v101 = vld [vmem:[%s0 + $0x48] sm:$0xff]
    %v102 = vld [vmem:[%s0 + $0x50] sm:$0xff]
    %v103 = vld [vmem:[%s0 + $0x58] sm:$0xff]
    %v104 = vld [vmem:[%s0 + $0x60] sm:$0xff]
    %v105 = vld [vmem:[%s0 + $0x68] sm:$0xff]
    %v106 = vld [vmem:[%s0 + $0x70] sm:$0xff]
    %v107 = vld [vmem:[%s0 + $0x78] sm:$0xff]
    %s108 = scalar_lea.vmem [#allocation2], 16
    %109 = vst.msk [vmem:[%s108 + $0x1] sm:$0xff] %vm40, %v92
    %110 = vst.msk [vmem:[%s108 + $0x11] sm:$0xff] %vm40, %v93
    %111 = vst.msk [vmem:[%s108 + $0x21] sm:$0xff] %vm40, %v94
    %112 = vst.msk [vmem:[%s108 + $0x31] sm:$0xff] %vm40, %v95
    %113 = vst.msk [vmem:[%s108 + $0x41] sm:$0xff] %vm40, %v96
    %114 = vst.msk [vmem:[%s108 + $0x51] sm:$0xff] %vm40, %v97
    %115 = vst.msk [vmem:[%s108 + $0x61] sm:$0xff] %vm40, %v98
    %116 = vst.msk [vmem:[%s108 + $0x71] sm:$0xff] %vm40, %v99
    %117 = vst.msk [vmem:[%s108 + $0xa1] sm:$0xff] %vm40, %v100
    %118 = vst.msk [vmem:[%s108 + $0xb1] sm:$0xff] %vm40, %v101
    %119 = vst.msk [vmem:[%s108 + $0xc1] sm:$0xff] %vm40, %v102
    %120 = vst.msk [vmem:[%s108 + $0xd1] sm:$0xff] %vm40, %v103
    %121 = vst.msk [vmem:[%s108 + $0xe1] sm:$0xff] %vm40, %v104
    %122 = vst.msk [vmem:[%s108 + $0xf1] sm:$0xff] %vm40, %v105
    %123 = vst.msk [vmem:[%s108 + $0x101] sm:$0xff] %vm40, %v106
    %124 = vst.msk [vmem:[%s108 + $0x111] sm:$0xff] %vm40, %v107
    %v125 = vld [vmem:[#allocation2] sm:$0xff]
    %v126 = vld [vmem:[#allocation2 + $0x10] sm:$0xff]
    %v127 = vld [vmem:[#allocation2 + $0x20] sm:$0xff]
    %v128 = vld [vmem:[#allocation2 + $0x30] sm:$0xff]
    %v129 = vld [vmem:[#allocation2 + $0x40] sm:$0xff]
    %v130 = vld [vmem:[#allocation2 + $0x50] sm:$0xff]
    %v131 = vld [vmem:[#allocation2 + $0x60] sm:$0xff]
    %v132 = vld [vmem:[#allocation2 + $0x70] sm:$0xff]
    %v133 = vld [vmem:[#allocation2 + $0xa0] sm:$0xff]
    %v134 = vld [vmem:[#allocation2 + $0xb0] sm:$0xff]
    %v135 = vld [vmem:[#allocation2 + $0xc0] sm:$0xff]
    %v136 = vld [vmem:[#allocation2 + $0xd0] sm:$0xff]
    %v137 = vld [vmem:[#allocation2 + $0xe0] sm:$0xff]
    %v138 = vld [vmem:[#allocation2 + $0xf0] sm:$0xff]
    %v139 = vld [vmem:[#allocation2 + $0x100] sm:$0xff]
    %v140 = vld [vmem:[#allocation2 + $0x110] sm:$0xff]
    %v141 = vpack.c.bf16 %v126, %v125
    %v142 = vpack.c.bf16 %v128, %v127
    %v143 = vpack.c.bf16 %v130, %v129
    %v144 = vpack.c.bf16 %v132, %v131
    %v145 = vpack.c.bf16 %v134, %v133
    %v146 = vpack.c.bf16 %v136, %v135
    %v147 = vpack.c.bf16 %v138, %v137
    %v148 = vpack.c.bf16 %v140, %v139
    %v149 = vld [vmem:[#allocation2 + $0x1] sm:$0xff]
    %v150 = vld [vmem:[#allocation2 + $0x11] sm:$0xff]
    %v151 = vld [vmem:[#allocation2 + $0x21] sm:$0xff]
    %v152 = vld [vmem:[#allocation2 + $0x31] sm:$0xff]
    %v153 = vld [vmem:[#allocation2 + $0x41] sm:$0xff]
    %v154 = vld [vmem:[#allocation2 + $0x51] sm:$0xff]
    %v155 = vld [vmem:[#allocation2 + $0x61] sm:$0xff]
    %v156 = vld [vmem:[#allocation2 + $0x71] sm:$0xff]
    %v157 = vld [vmem:[#allocation2 + $0xa1] sm:$0xff]
    %v158 = vld [vmem:[#allocation2 + $0xb1] sm:$0xff]
    %v159 = vld [vmem:[#allocation2 + $0xc1] sm:$0xff]
    %v160 = vld [vmem:[#allocation2 + $0xd1] sm:$0xff]
    %v161 = vld [vmem:[#allocation2 + $0xe1] sm:$0xff]
    %v162 = vld [vmem:[#allocation2 + $0xf1] sm:$0xff]
    %v163 = vld [vmem:[#allocation2 + $0x101] sm:$0xff]
    %v164 = vld [vmem:[#allocation2 + $0x111] sm:$0xff]
    %v165 = vpack.c.bf16 %v150, %v149
    %v166 = vpack.c.bf16 %v152, %v151
    %v167 = vpack.c.bf16 %v154, %v153
    %v168 = vpack.c.bf16 %v156, %v155
    %v169 = vpack.c.bf16 %v158, %v157
    %v170 = vpack.c.bf16 %v160, %v159
    %v171 = vpack.c.bf16 %v162, %v161
    %v172 = vpack.c.bf16 %v164, %v163
    %v173 = vld [vmem:[#allocation2 + $0x2] sm:$0xff]
    %v174 = vld [vmem:[#allocation2 + $0x12] sm:$0xff]
    %v175 = vld [vmem:[#allocation2 + $0x22] sm:$0xff]
    %v176 = vld [vmem:[#allocation2 + $0x32] sm:$0xff]
    %v177 = vld [vmem:[#allocation2 + $0x42] sm:$0xff]
    %v178 = vld [vmem:[#allocation2 + $0x52] sm:$0xff]
    %v179 = vld [vmem:[#allocation2 + $0x62] sm:$0xff]
    %v180 = vld [vmem:[#allocation2 + $0x72] sm:$0xff]
    %v181 = vld [vmem:[#allocation2 + $0xa2] sm:$0xff]
    %v182 = vld [vmem:[#allocation2 + $0xb2] sm:$0xff]
    %v183 = vld [vmem:[#allocation2 + $0xc2] sm:$0xff]
    %v184 = vld [vmem:[#allocation2 + $0xd2] sm:$0xff]
    %v185 = vld [vmem:[#allocation2 + $0xe2] sm:$0xff]
    %v186 = vld [vmem:[#allocation2 + $0xf2] sm:$0xff]
    %v187 = vld [vmem:[#allocation2 + $0x102] sm:$0xff]
    %v188 = vld [vmem:[#allocation2 + $0x112] sm:$0xff]
    %v189 = vpack.c.bf16 %v174, %v173
    %v190 = vpack.c.bf16 %v176, %v175
    %v191 = vpack.c.bf16 %v178, %v177
    %v192 = vpack.c.bf16 %v180, %v179
    %v193 = vpack.c.bf16 %v182, %v181
    %v194 = vpack.c.bf16 %v184, %v183
    %v195 = vpack.c.bf16 %v186, %v185
    %v196 = vpack.c.bf16 %v188, %v187
    %v197 = vld [vmem:[%s108] sm:$0xff]
    %v198 = vld [vmem:[%s108 + $0x10] sm:$0xff]
    %v199 = vld [vmem:[%s108 + $0x20] sm:$0xff]
    %v200 = vld [vmem:[%s108 + $0x30] sm:$0xff]
    %v201 = vld [vmem:[%s108 + $0x40] sm:$0xff]
    %v202 = vld [vmem:[%s108 + $0x50] sm:$0xff]
    %v203 = vld [vmem:[%s108 + $0x60] sm:$0xff]
    %v204 = vld [vmem:[%s108 + $0x70] sm:$0xff]
    %v205 = vld [vmem:[%s108 + $0xa0] sm:$0xff]
    %v206 = vld [vmem:[%s108 + $0xb0] sm:$0xff]
    %v207 = vld [vmem:[%s108 + $0xc0] sm:$0xff]
    %v208 = vld [vmem:[%s108 + $0xd0] sm:$0xff]
    %v209 = vld [vmem:[%s108 + $0xe0] sm:$0xff]
    %v210 = vld [vmem:[%s108 + $0xf0] sm:$0xff]
    %v211 = vld [vmem:[%s108 + $0x100] sm:$0xff]
    %v212 = vld [vmem:[%s108 + $0x110] sm:$0xff]
    %v213 = vpack.c.bf16 %v198, %v197
    %v214 = vpack.c.bf16 %v200, %v199
    %v215 = vpack.c.bf16 %v202, %v201
    %v216 = vpack.c.bf16 %v204, %v203
    %v217 = vpack.c.bf16 %v206, %v205
    %v218 = vpack.c.bf16 %v208, %v207
    %v219 = vpack.c.bf16 %v210, %v209
    %v220 = vpack.c.bf16 %v212, %v211
    %v221 = vld [vmem:[%s108 + $0x1] sm:$0xff]
    %v222 = vld [vmem:[%s108 + $0x11] sm:$0xff]
    %v223 = vld [vmem:[%s108 + $0x21] sm:$0xff]
    %v224 = vld [vmem:[%s108 + $0x31] sm:$0xff]
    %v225 = vld [vmem:[%s108 + $0x41] sm:$0xff]
    %v226 = vld [vmem:[%s108 + $0x51] sm:$0xff]
    %v227 = vld [vmem:[%s108 + $0x61] sm:$0xff]
    %v228 = vld [vmem:[%s108 + $0x71] sm:$0xff]
    %v229 = vld [vmem:[%s108 + $0xa1] sm:$0xff]
    %v230 = vld [vmem:[%s108 + $0xb1] sm:$0xff]
    %v231 = vld [vmem:[%s108 + $0xc1] sm:$0xff]
    %v232 = vld [vmem:[%s108 + $0xd1] sm:$0xff]
    %v233 = vld [vmem:[%s108 + $0xe1] sm:$0xff]
    %v234 = vld [vmem:[%s108 + $0xf1] sm:$0xff]
    %v235 = vld [vmem:[%s108 + $0x101] sm:$0xff]
    %v236 = vld [vmem:[%s108 + $0x111] sm:$0xff]
    %v237 = vpack.c.bf16 %v222, %v221
    %v238 = vpack.c.bf16 %v224, %v223
    %v239 = vpack.c.bf16 %v226, %v225
    %v240 = vpack.c.bf16 %v228, %v227
    %v241 = vpack.c.bf16 %v230, %v229
    %v242 = vpack.c.bf16 %v232, %v231
    %v243 = vpack.c.bf16 %v234, %v233
    %v244 = vpack.c.bf16 %v236, %v235
    %v245 = vld [vmem:[%s108 + $0x2] sm:$0xff]
    %v246 = vld [vmem:[%s108 + $0x12] sm:$0xff]
    %v247 = vld [vmem:[%s108 + $0x22] sm:$0xff]
    %v248 = vld [vmem:[%s108 + $0x32] sm:$0xff]
    %v249 = vld [vmem:[%s108 + $0x42] sm:$0xff]
    %v250 = vld [vmem:[%s108 + $0x52] sm:$0xff]
    %v251 = vld [vmem:[%s108 + $0x62] sm:$0xff]
    %v252 = vld [vmem:[%s108 + $0x72] sm:$0xff]
    %v253 = vld [vmem:[%s108 + $0xa2] sm:$0xff]
    %v254 = vld [vmem:[%s108 + $0xb2] sm:$0xff]
    %v255 = vld [vmem:[%s108 + $0xc2] sm:$0xff]
    %v256 = vld [vmem:[%s108 + $0xd2] sm:$0xff]
    %v257 = vld [vmem:[%s108 + $0xe2] sm:$0xff]
    %v258 = vld [vmem:[%s108 + $0xf2] sm:$0xff]
    %v259 = vld [vmem:[%s108 + $0x102] sm:$0xff]
    %v260 = vld [vmem:[%s108 + $0x112] sm:$0xff]
    %v261 = vpack.c.bf16 %v246, %v245
    %v262 = vpack.c.bf16 %v248, %v247
    %v263 = vpack.c.bf16 %v250, %v249
    %v264 = vpack.c.bf16 %v252, %v251
    %v265 = vpack.c.bf16 %v254, %v253
    %v266 = vpack.c.bf16 %v256, %v255
    %v267 = vpack.c.bf16 %v258, %v257
    %v268 = vpack.c.bf16 %v260, %v259
    %s269 = scalar_lea.vmem [#allocation2], 32
    %v270 = vld [vmem:[%s269] sm:$0xff]
    %v271 = vld [vmem:[%s269 + $0x10] sm:$0xff]
    %v272 = vld [vmem:[%s269 + $0x20] sm:$0xff]
    %v273 = vld [vmem:[%s269 + $0x30] sm:$0xff]
    %v274 = vld [vmem:[%s269 + $0x40] sm:$0xff]
    %v275 = vld [vmem:[%s269 + $0x50] sm:$0xff]
    %v276 = vld [vmem:[%s269 + $0x60] sm:$0xff]
    %v277 = vld [vmem:[%s269 + $0x70] sm:$0xff]
    %v278 = vld [vmem:[%s269 + $0xa0] sm:$0xff]
    %v279 = vld [vmem:[%s269 + $0xb0] sm:$0xff]
    %v280 = vld [vmem:[%s269 + $0xc0] sm:$0xff]
    %v281 = vld [vmem:[%s269 + $0xd0] sm:$0xff]
    %v282 = vld [vmem:[%s269 + $0xe0] sm:$0xff]
    %v283 = vld [vmem:[%s269 + $0xf0] sm:$0xff]
    %v284 = vld [vmem:[%s269 + $0x100] sm:$0xff]
    %v285 = vld [vmem:[%s269 + $0x110] sm:$0xff]
    %v286 = vpack.c.bf16 %v271, %v270
    %v287 = vpack.c.bf16 %v273, %v272
    %v288 = vpack.c.bf16 %v275, %v274
    %v289 = vpack.c.bf16 %v277, %v276
    %v290 = vpack.c.bf16 %v279, %v278
    %v291 = vpack.c.bf16 %v281, %v280
    %v292 = vpack.c.bf16 %v283, %v282
    %v293 = vpack.c.bf16 %v285, %v284
    %v294 = vld [vmem:[%s269 + $0x1] sm:$0xff]
    %v295 = vld [vmem:[%s269 + $0x11] sm:$0xff]
    %v296 = vld [vmem:[%s269 + $0x21] sm:$0xff]
    %v297 = vld [vmem:[%s269 + $0x31] sm:$0xff]
    %v298 = vld [vmem:[%s269 + $0x41] sm:$0xff]
    %v299 = vld [vmem:[%s269 + $0x51] sm:$0xff]
    %v300 = vld [vmem:[%s269 + $0x61] sm:$0xff]
    %v301 = vld [vmem:[%s269 + $0x71] sm:$0xff]
    %v302 = vld [vmem:[%s269 + $0xa1] sm:$0xff]
    %v303 = vld [vmem:[%s269 + $0xb1] sm:$0xff]
    %v304 = vld [vmem:[%s269 + $0xc1] sm:$0xff]
    %v305 = vld [vmem:[%s269 + $0xd1] sm:$0xff]
    %v306 = vld [vmem:[%s269 + $0xe1] sm:$0xff]
    %v307 = vld [vmem:[%s269 + $0xf1] sm:$0xff]
    %v308 = vld [vmem:[%s269 + $0x101] sm:$0xff]
    %v309 = vld [vmem:[%s269 + $0x111] sm:$0xff]
    %v310 = vpack.c.bf16 %v295, %v294
    %v311 = vpack.c.bf16 %v297, %v296
    %v312 = vpack.c.bf16 %v299, %v298
    %v313 = vpack.c.bf16 %v301, %v300
    %v314 = vpack.c.bf16 %v303, %v302
    %v315 = vpack.c.bf16 %v305, %v304
    %v316 = vpack.c.bf16 %v307, %v306
    %v317 = vpack.c.bf16 %v309, %v308
    %v318 = vld [vmem:[%s269 + $0x2] sm:$0xff]
    %v319 = vld [vmem:[%s269 + $0x12] sm:$0xff]
    %v320 = vld [vmem:[%s269 + $0x22] sm:$0xff]
    %v321 = vld [vmem:[%s269 + $0x32] sm:$0xff]
    %v322 = vld [vmem:[%s269 + $0x42] sm:$0xff]
    %v323 = vld [vmem:[%s269 + $0x52] sm:$0xff]
    %v324 = vld [vmem:[%s269 + $0x62] sm:$0xff]
    %v325 = vld [vmem:[%s269 + $0x72] sm:$0xff]
    %v326 = vld [vmem:[%s269 + $0xa2] sm:$0xff]
    %v327 = vld [vmem:[%s269 + $0xb2] sm:$0xff]
    %v328 = vld [vmem:[%s269 + $0xc2] sm:$0xff]
    %v329 = vld [vmem:[%s269 + $0xd2] sm:$0xff]
    %v330 = vld [vmem:[%s269 + $0xe2] sm:$0xff]
    %v331 = vld [vmem:[%s269 + $0xf2] sm:$0xff]
    %v332 = vld [vmem:[%s269 + $0x102] sm:$0xff]
    %v333 = vld [vmem:[%s269 + $0x112] sm:$0xff]
    %v334 = vpack.c.bf16 %v319, %v318
    %v335 = vpack.c.bf16 %v321, %v320
    %v336 = vpack.c.bf16 %v323, %v322
    %v337 = vpack.c.bf16 %v325, %v324
    %v338 = vpack.c.bf16 %v327, %v326
    %v339 = vpack.c.bf16 %v329, %v328
    %v340 = vpack.c.bf16 %v331, %v330
    %v341 = vpack.c.bf16 %v333, %v332
    %350 = vrot.lane.b32.xlu0 %v165, 32
    %v351 = vpop.permute.xlu0 %350
    %352 = vrot.lane.b32.xlu0 %v166, 32
    %v353 = vpop.permute.xlu0 %352
    %354 = vrot.lane.b32.xlu0 %v167, 32
    %v355 = vpop.permute.xlu0 %354
    %356 = vrot.lane.b32.xlu0 %v168, 32
    %v357 = vpop.permute.xlu0 %356
    %358 = vrot.lane.b32.xlu0 %v169, 32
    %v359 = vpop.permute.xlu0 %358
    %360 = vrot.lane.b32.xlu0 %v170, 32
    %v361 = vpop.permute.xlu0 %360
    %362 = vrot.lane.b32.xlu0 %v171, 32
    %v363 = vpop.permute.xlu0 %362
    %364 = vrot.lane.b32.xlu0 %v172, 32
    %v365 = vpop.permute.xlu0 %364
    %374 = vrot.lane.b32.xlu0 %v189, 64
    %v375 = vpop.permute.xlu0 %374
    %376 = vrot.lane.b32.xlu0 %v190, 64
    %v377 = vpop.permute.xlu0 %376
    %378 = vrot.lane.b32.xlu0 %v191, 64
    %v379 = vpop.permute.xlu0 %378
    %380 = vrot.lane.b32.xlu0 %v192, 64
    %v381 = vpop.permute.xlu0 %380
    %382 = vrot.lane.b32.xlu0 %v193, 64
    %v383 = vpop.permute.xlu0 %382
    %384 = vrot.lane.b32.xlu0 %v194, 64
    %v385 = vpop.permute.xlu0 %384
    %386 = vrot.lane.b32.xlu0 %v195, 64
    %v387 = vpop.permute.xlu0 %386
    %388 = vrot.lane.b32.xlu0 %v196, 64
    %v389 = vpop.permute.xlu0 %388
    %398 = vrot.lane.b32.xlu0 %v213, 96
    %v399 = vpop.permute.xlu0 %398
    %400 = vrot.lane.b32.xlu0 %v214, 96
    %v401 = vpop.permute.xlu0 %400
    %402 = vrot.lane.b32.xlu0 %v215, 96
    %v403 = vpop.permute.xlu0 %402
    %404 = vrot.lane.b32.xlu0 %v216, 96
    %v405 = vpop.permute.xlu0 %404
    %406 = vrot.lane.b32.xlu0 %v217, 96
    %v407 = vpop.permute.xlu0 %406
    %408 = vrot.lane.b32.xlu0 %v218, 96
    %v409 = vpop.permute.xlu0 %408
    %410 = vrot.lane.b32.xlu0 %v219, 96
    %v411 = vpop.permute.xlu0 %410
    %412 = vrot.lane.b32.xlu0 %v220, 96
    %v413 = vpop.permute.xlu0 %412
    %422 = vrot.lane.b32.xlu0 %v261, 32
    %v423 = vpop.permute.xlu0 %422
    %424 = vrot.lane.b32.xlu0 %v262, 32
    %v425 = vpop.permute.xlu0 %424
    %426 = vrot.lane.b32.xlu0 %v263, 32
    %v427 = vpop.permute.xlu0 %426
    %428 = vrot.lane.b32.xlu0 %v264, 32
    %v429 = vpop.permute.xlu0 %428
    %430 = vrot.lane.b32.xlu0 %v265, 32
    %v431 = vpop.permute.xlu0 %430
    %432 = vrot.lane.b32.xlu0 %v266, 32
    %v433 = vpop.permute.xlu0 %432
    %434 = vrot.lane.b32.xlu0 %v267, 32
    %v435 = vpop.permute.xlu0 %434
    %436 = vrot.lane.b32.xlu0 %v268, 32
    %v437 = vpop.permute.xlu0 %436
    %446 = vrot.lane.b32.xlu0 %v286, 64
    %v447 = vpop.permute.xlu0 %446
    %448 = vrot.lane.b32.xlu0 %v287, 64
    %v449 = vpop.permute.xlu0 %448
    %450 = vrot.lane.b32.xlu0 %v288, 64
    %v451 = vpop.permute.xlu0 %450
    %452 = vrot.lane.b32.xlu0 %v289, 64
    %v453 = vpop.permute.xlu0 %452
    %454 = vrot.lane.b32.xlu0 %v290, 64
    %v455 = vpop.permute.xlu0 %454
    %456 = vrot.lane.b32.xlu0 %v291, 64
    %v457 = vpop.permute.xlu0 %456
    %458 = vrot.lane.b32.xlu0 %v292, 64
    %v459 = vpop.permute.xlu0 %458
    %460 = vrot.lane.b32.xlu0 %v293, 64
    %v461 = vpop.permute.xlu0 %460
    %470 = vrot.lane.b32.xlu0 %v310, 96
    %v471 = vpop.permute.xlu0 %470
    %472 = vrot.lane.b32.xlu0 %v311, 96
    %v473 = vpop.permute.xlu0 %472
    %474 = vrot.lane.b32.xlu0 %v312, 96
    %v475 = vpop.permute.xlu0 %474
    %476 = vrot.lane.b32.xlu0 %v313, 96
    %v477 = vpop.permute.xlu0 %476
    %478 = vrot.lane.b32.xlu0 %v314, 96
    %v479 = vpop.permute.xlu0 %478
    %480 = vrot.lane.b32.xlu0 %v315, 96
    %v481 = vpop.permute.xlu0 %480
    %482 = vrot.lane.b32.xlu0 %v316, 96
    %v483 = vpop.permute.xlu0 %482
    %484 = vrot.lane.b32.xlu0 %v317, 96
    %v485 = vpop.permute.xlu0 %484
    %v488 = vsel %vm40, %v141, %v351
    %v491 = vsel %vm40, %v142, %v353
    %v494 = vsel %vm40, %v143, %v355
    %v497 = vsel %vm40, %v144, %v357
    %v500 = vsel %vm40, %v145, %v359
    %v503 = vsel %vm40, %v146, %v361
    %v506 = vsel %vm40, %v147, %v363
    %v509 = vsel %vm40, %v148, %v365
    %vm510 = vcmask 523264
    %v512 = vsel %vm510, %v488, %v375
    %v514 = vsel %vm510, %v491, %v377
    %v516 = vsel %vm510, %v494, %v379
    %v518 = vsel %vm510, %v497, %v381
    %v520 = vsel %vm510, %v500, %v383
    %v522 = vsel %vm510, %v503, %v385
    %v524 = vsel %vm510, %v506, %v387
    %v526 = vsel %vm510, %v509, %v389
    %vm527 = vcmask 785408
    %v529 = vsel %vm527, %v512, %v399
    %v532 = vsel %vm527, %v514, %v401
    %v535 = vsel %vm527, %v516, %v403
    %v538 = vsel %vm527, %v518, %v405
    %v541 = vsel %vm527, %v520, %v407
    %v544 = vsel %vm527, %v522, %v409
    %v547 = vsel %vm527, %v524, %v411
    %v550 = vsel %vm527, %v526, %v413
    %v554 = vsel %vm40, %v237, %v423
    %v557 = vsel %vm40, %v238, %v425
    %v560 = vsel %vm40, %v239, %v427
    %v563 = vsel %vm40, %v240, %v429
    %v566 = vsel %vm40, %v241, %v431
    %v569 = vsel %vm40, %v242, %v433
    %v572 = vsel %vm40, %v243, %v435
    %v575 = vsel %vm40, %v244, %v437
    %v577 = vsel %vm510, %v554, %v447
    %v579 = vsel %vm510, %v557, %v449
    %v581 = vsel %vm510, %v560, %v451
    %v583 = vsel %vm510, %v563, %v453
    %v585 = vsel %vm510, %v566, %v455
    %v587 = vsel %vm510, %v569, %v457
    %v589 = vsel %vm510, %v572, %v459
    %v591 = vsel %vm510, %v575, %v461
    %v593 = vsel %vm527, %v577, %v471
    %v596 = vsel %vm527, %v579, %v473
    %v599 = vsel %vm527, %v581, %v475
    %v602 = vsel %vm527, %v583, %v477
    %v605 = vsel %vm527, %v585, %v479
    %v608 = vsel %vm527, %v587, %v481
    %v611 = vsel %vm527, %v589, %v483
    %v614 = vsel %vm527, %v591, %v485
    %v616 = vld [vmem:[%s1] sm:$0xf]
    %v617 = vld [vmem:[%s1 + $0x4] sm:$0xf]
    %v618 = vld [vmem:[%s1 + $0x8] sm:$0xf]
    %v619 = vld [vmem:[%s1 + $0xc] sm:$0xf]
    %v620 = vld [vmem:[%s1 + $0x10] sm:$0xf]
    %v621 = vld [vmem:[%s1 + $0x14] sm:$0xf]
    %v622 = vld [vmem:[%s1 + $0x18] sm:$0xf]
    %v623 = vld [vmem:[%s1 + $0x1c] sm:$0xf]
    %v624 = vld [vmem:[%s1 + $0x20] sm:$0xf]
    %v625 = vld [vmem:[%s1 + $0x24] sm:$0xf]
    %v626 = vld [vmem:[%s1 + $0x28] sm:$0xf]
    %v627 = vld [vmem:[%s1 + $0x2c] sm:$0xf]
    %v628 = vld [vmem:[%s1 + $0x30] sm:$0xf]
    %v629 = vld [vmem:[%s1 + $0x34] sm:$0xf]
    %v630 = vld [vmem:[%s1 + $0x38] sm:$0xf]
    %v631 = vld [vmem:[%s1 + $0x3c] sm:$0xf]
    %v632 = vld [vmem:[%s1 + $0x40] sm:$0xf]
    %v633 = vld [vmem:[%s1 + $0x44] sm:$0xf]
    %v634 = vld [vmem:[%s1 + $0x48] sm:$0xf]
    %v635 = vld [vmem:[%s1 + $0x4c] sm:$0xf]
    %v636 = vld [vmem:[%s1 + $0x50] sm:$0xf]
    %v637 = vld [vmem:[%s1 + $0x54] sm:$0xf]
    %v638 = vld [vmem:[%s1 + $0x58] sm:$0xf]
    %v639 = vld [vmem:[%s1 + $0x5c] sm:$0xf]
    %v640 = vld [vmem:[%s1 + $0x60] sm:$0xf]
    %v641 = vld [vmem:[%s1 + $0x64] sm:$0xf]
    %v642 = vld [vmem:[%s1 + $0x68] sm:$0xf]
    %v643 = vld [vmem:[%s1 + $0x6c] sm:$0xf]
    %v644 = vld [vmem:[%s1 + $0x70] sm:$0xf]
    %v645 = vld [vmem:[%s1 + $0x74] sm:$0xf]
    %v646 = vld [vmem:[%s1 + $0x78] sm:$0xf]
    %v647 = vld [vmem:[%s1 + $0x7c] sm:$0xf]
    %v648 = vld [vmem:[%s1 + $0x80] sm:$0xf]
    %v649 = vld [vmem:[%s1 + $0x84] sm:$0xf]
    %v650 = vld [vmem:[%s1 + $0x88] sm:$0xf]
    %v651 = vld [vmem:[%s1 + $0x8c] sm:$0xf]
    %v688 = vunpack.c.l.b16 %v616
    %v689 = vunpack.c.l.b16 %v617
    %v690 = vunpack.c.l.b16 %v618
    %v691 = vunpack.c.l.b16 %v619
    %v692 = vunpack.c.l.b16 %v620
    %v693 = vunpack.c.l.b16 %v621
    %v694 = vunpack.c.l.b16 %v622
    %v695 = vunpack.c.l.b16 %v623
    %v696 = vunpack.c.l.b16 %v624
    %v697 = vunpack.c.l.b16 %v625
    %v698 = vunpack.c.l.b16 %v626
    %v699 = vunpack.c.l.b16 %v627
    %v700 = vunpack.c.l.b16 %v628
    %v701 = vunpack.c.l.b16 %v629
    %v702 = vunpack.c.l.b16 %v630
    %v703 = vunpack.c.l.b16 %v631
    %v704 = vunpack.c.l.b16 %v632
    %v705 = vunpack.c.l.b16 %v633
    %v706 = vunpack.c.l.b16 %v634
    %v707 = vunpack.c.l.b16 %v635
    %v708 = vunpack.c.l.b16 %v636
    %v709 = vunpack.c.l.b16 %v637
    %v710 = vunpack.c.l.b16 %v638
    %v711 = vunpack.c.l.b16 %v639
    %v712 = vunpack.c.l.b16 %v640
    %v713 = vunpack.c.l.b16 %v641
    %v714 = vunpack.c.l.b16 %v642
    %v715 = vunpack.c.l.b16 %v643
    %v716 = vunpack.c.l.b16 %v644
    %v717 = vunpack.c.l.b16 %v645
    %v718 = vunpack.c.l.b16 %v646
    %v719 = vunpack.c.l.b16 %v647
    %v720 = vunpack.c.l.b16 %v648
    %v721 = vunpack.c.l.b16 %v649
    %v722 = vunpack.c.l.b16 %v650
    %v723 = vunpack.c.l.b16 %v651
    %v724 = vpack.c.b16 %v689, %v688
    %v725 = vpack.c.b16 %v691, %v690
    %v726 = vpack.c.b16 %v693, %v692
    %v727 = vpack.c.b16 %v695, %v694
    %v728 = vpack.c.b16 %v697, %v696
    %v729 = vpack.c.b16 %v699, %v698
    %v730 = vpack.c.b16 %v701, %v700
    %v731 = vpack.c.b16 %v703, %v702
    %v732 = vpack.c.b16 %v705, %v704
    %v733 = vpack.c.b16 %v707, %v706
    %v734 = vpack.c.b16 %v709, %v708
    %v735 = vpack.c.b16 %v711, %v710
    %v736 = vpack.c.b16 %v713, %v712
    %v737 = vpack.c.b16 %v715, %v714
    %v738 = vpack.c.b16 %v717, %v716
    %v739 = vpack.c.b16 %v719, %v718
    %v740 = vpack.c.b16 %v721, %v720
    %v741 = vpack.c.b16 %v723, %v722
    %v761 = vsel %vm40, %v334, 0
    %v764 = vsel %vm40, %v335, 0
    %v767 = vsel %vm40, %v336, 0
    %v770 = vsel %vm40, %v337, 0
    %v773 = vsel %vm40, %v338, 0
    %v776 = vsel %vm40, %v339, 0
    %v779 = vsel %vm40, %v340, 0
    %v782 = vsel %vm40, %v341, 0
    %784 = vmatprep.subr.bf16.mxu0 0
    %785 = vmatpush1.bf16.msra.mxu0 %v724
    %786 = vmatprep.subr.bf16.mxu0 0
    %787 = vmatpush1.bf16.msra.mxu0 %v725
    %788 = vmatprep.subr.bf16.mxu0 0
    %789 = vmatpush1.bf16.msra.mxu0 %v726
    %790 = vmatprep.subr.bf16.mxu0 0
    %791 = vmatpush1.bf16.msra.mxu0 %v727
    %792 = vmatprep.subr.bf16.mxu0 0
    %793 = vmatpush1.bf16.msra.mxu0 %v728
    %794 = vmatprep.subr.bf16.mxu0 0
    %795 = vmatpush1.bf16.msra.mxu0 %v729
    %796 = vmatprep.subr.bf16.mxu0 0
    %797 = vmatpush1.bf16.msra.mxu0 %v730
    %798 = vmatprep.subr.bf16.mxu0 0
    %799 = vmatpush1.bf16.msra.mxu0 %v731
    %800 = vmatprep.subr.bf16.mxu0 0
    %801 = vmatpush1.bf16.msra.mxu0 %v732
    %802 = vmatprep.subr.bf16.mxu0 0
    %803 = vmatpush1.bf16.msra.mxu0 %v733
    %804 = vmatprep.subr.bf16.mxu0 0
    %805 = vmatpush1.bf16.msra.mxu0 %v734
    %806 = vmatprep.subr.bf16.mxu0 0
    %807 = vmatpush1.bf16.msra.mxu0 %v735
    %808 = vmatprep.subr.bf16.mxu0 0
    %809 = vmatpush1.bf16.msra.mxu0 %v736
    %810 = vmatprep.subr.bf16.mxu0 0
    %811 = vmatpush1.bf16.msra.mxu0 %v737
    %812 = vmatprep.subr.bf16.mxu0 0
    %813 = vmatpush1.bf16.msra.mxu0 %v738
    %814 = vmatprep.subr.bf16.mxu0 0
    %815 = vmatpush1.bf16.msra.mxu0 %v739
    %816 = vmatprep.mubr.bf16.mxu0 %v593
    %817 = vmatmul.mubr.bf16.gmra.mrb[0].mxu0 %v529
    %v818 = vpop.f32.mrb[0].mxu0
    %v819 = vadd.f32 0.0, %v818
    %v820 = vpop.f32.mrb[0].mxu0
    %v821 = vpop.f32.mrb[0].mxu0
    %v822 = vadd.f32 0.0, %v821
    %v823 = vpop.f32.mrb[0].mxu0
    %824 = vmatprep.mubr.bf16.mxu0 %v596
    %825 = vmatmul.mubr.bf16.gmra.mrb[0].mxu0 %v532
    %v826 = vpop.f32.mrb[0].mxu0
    %v827 = vadd.f32 0.0, %v826
    %v828 = vpop.f32.mrb[0].mxu0
    %v829 = vpop.f32.mrb[0].mxu0
    %v830 = vadd.f32 0.0, %v829
    %v831 = vpop.f32.mrb[0].mxu0
    %832 = vmatprep.mubr.bf16.mxu0 %v599
    %833 = vmatmul.mubr.bf16.gmra.mrb[0].mxu0 %v535
    %v834 = vpop.f32.mrb[0].mxu0
    %v835 = vadd.f32 0.0, %v834
    %v836 = vpop.f32.mrb[0].mxu0
    %v837 = vpop.f32.mrb[0].mxu0
    %v838 = vadd.f32 0.0, %v837
    %v839 = vpop.f32.mrb[0].mxu0
    %840 = vmatprep.mubr.bf16.mxu0 %v602
    %841 = vmatmul.mubr.bf16.gmra.mrb[0].mxu0 %v538
    %v842 = vpop.f32.mrb[0].mxu0
    %v843 = vadd.f32 0.0, %v842
    %v844 = vpop.f32.mrb[0].mxu0
    %v845 = vpop.f32.mrb[0].mxu0
    %v846 = vadd.f32 0.0, %v845
    %v847 = vpop.f32.mrb[0].mxu0
    %848 = vmatprep.mubr.bf16.mxu0 %v605
    %849 = vmatmul.mubr.bf16.gmra.mrb[0].mxu0 %v541
    %v850 = vpop.f32.mrb[0].mxu0
    %v851 = vadd.f32 0.0, %v850
    %v852 = vpop.f32.mrb[0].mxu0
    %v853 = vpop.f32.mrb[0].mxu0
    %v854 = vadd.f32 0.0, %v853
    %v855 = vpop.f32.mrb[0].mxu0
    %856 = vmatprep.mubr.bf16.mxu0 %v608
    %857 = vmatmul.mubr.bf16.gmra.mrb[0].mxu0 %v544
    %v858 = vpop.f32.mrb[0].mxu0
    %v859 = vadd.f32 0.0, %v858
    %v860 = vpop.f32.mrb[0].mxu0
    %v861 = vpop.f32.mrb[0].mxu0
    %v862 = vadd.f32 0.0, %v861
    %v863 = vpop.f32.mrb[0].mxu0
    %864 = vmatprep.mubr.bf16.mxu0 %v611
    %865 = vmatmul.mubr.bf16.gmra.mrb[0].mxu0 %v547
    %v866 = vpop.f32.mrb[0].mxu0
    %v867 = vadd.f32 0.0, %v866
    %v868 = vpop.f32.mrb[0].mxu0
    %v869 = vpop.f32.mrb[0].mxu0
    %v870 = vadd.f32 0.0, %v869
    %v871 = vpop.f32.mrb[0].mxu0
    %872 = vmatprep.mubr.bf16.mxu0 %v614
    %873 = vmatmul.mubr.bf16.gmra.mrb[0].mxu0 %v550
    %v874 = vpop.f32.mrb[0].mxu0
    %v875 = vadd.f32 0.0, %v874
    %v876 = vpop.f32.mrb[0].mxu0
    %v877 = vpop.f32.mrb[0].mxu0
    %v878 = vadd.f32 0.0, %v877
    %v879 = vpop.f32.mrb[0].mxu0
    %880 = vdwg.mxu0
    %881 = vmatprep.subr.bf16.mxu0 0
    %882 = vmatpush1.bf16.msra.mxu0 %v740
    %883 = vmatprep.subr.bf16.mxu0 0
    %884 = vmatpush1.bf16.msra.mxu0 %v741
    %885 = vmatprep.subr.bf16.mxu0 0
    %886 = vmatpush1.bf16.msra.mxu0 0
    %887 = vmatprep.subr.bf16.mxu0 0
    %888 = vmatpush1.bf16.msra.mxu0 0
    %889 = vmatprep.subr.bf16.mxu0 0
    %890 = vmatpush1.bf16.msra.mxu0 0
    %891 = vmatprep.subr.bf16.mxu0 0
    %892 = vmatpush1.bf16.msra.mxu0 0
    %893 = vmatprep.subr.bf16.mxu0 0
    %894 = vmatpush1.bf16.msra.mxu0 0
    %895 = vmatprep.subr.bf16.mxu0 0
    %896 = vmatpush1.bf16.msra.mxu0 0
    %897 = vmatprep.subr.bf16.mxu0 0
    %898 = vmatpush1.bf16.msra.mxu0 0
    %899 = vmatprep.subr.bf16.mxu0 0
    %900 = vmatpush1.bf16.msra.mxu0 0
    %901 = vmatprep.subr.bf16.mxu0 0
    %902 = vmatpush1.bf16.msra.mxu0 0
    %903 = vmatprep.subr.bf16.mxu0 0
    %904 = vmatpush1.bf16.msra.mxu0 0
    %905 = vmatprep.subr.bf16.mxu0 0
    %906 = vmatpush1.bf16.msra.mxu0 0
    %907 = vmatprep.subr.bf16.mxu0 0
    %908 = vmatpush1.bf16.msra.mxu0 0
    %909 = vmatprep.subr.bf16.mxu0 0
    %910 = vmatpush1.bf16.msra.mxu0 0
    %911 = vmatprep.subr.bf16.mxu0 0
    %912 = vmatpush1.bf16.msra.mxu0 0
    %913 = vmatprep.mubr.bf16.mxu0 0
    %914 = vmatmul.mubr.bf16.gmra.mrb[0].mxu0 %v761
    %v915 = vpop.f32.mrb[0].mxu0
    %v916 = vadd.f32 %v819, %v915
    %v917 = vpop.f32.mrb[0].mxu0
    %v918 = vpop.f32.mrb[0].mxu0
    %v919 = vadd.f32 %v822, %v918
    %v920 = vpop.f32.mrb[0].mxu0
    %921 = vmatprep.mubr.bf16.mxu0 0
    %922 = vmatmul.mubr.bf16.gmra.mrb[0].mxu0 %v764
    %v923 = vpop.f32.mrb[0].mxu0
    %v924 = vadd.f32 %v827, %v923
    %v925 = vpop.f32.mrb[0].mxu0
    %v926 = vpop.f32.mrb[0].mxu0
    %v927 = vadd.f32 %v830, %v926
    %v928 = vpop.f32.mrb[0].mxu0
    %929 = vmatprep.mubr.bf16.mxu0 0
    %930 = vmatmul.mubr.bf16.gmra.mrb[0].mxu0 %v767
    %v931 = vpop.f32.mrb[0].mxu0
    %v932 = vadd.f32 %v835, %v931
    %v933 = vpop.f32.mrb[0].mxu0
    %v934 = vpop.f32.mrb[0].mxu0
    %v935 = vadd.f32 %v838, %v934
    %v936 = vpop.f32.mrb[0].mxu0
    %937 = vmatprep.mubr.bf16.mxu0 0
    %938 = vmatmul.mubr.bf16.gmra.mrb[0].mxu0 %v770
    %v939 = vpop.f32.mrb[0].mxu0
    %v940 = vadd.f32 %v843, %v939
    %v941 = vpop.f32.mrb[0].mxu0
    %v942 = vpop.f32.mrb[0].mxu0
    %v943 = vadd.f32 %v846, %v942
    %v944 = vpop.f32.mrb[0].mxu0
    %945 = vmatprep.mubr.bf16.mxu0 0
    %946 = vmatmul.mubr.bf16.gmra.mrb[0].mxu0 %v773
    %v947 = vpop.f32.mrb[0].mxu0
    %v948 = vadd.f32 %v851, %v947
    %v949 = vpop.f32.mrb[0].mxu0
    %v950 = vpop.f32.mrb[0].mxu0
    %v951 = vadd.f32 %v854, %v950
    %v952 = vpop.f32.mrb[0].mxu0
    %953 = vmatprep.mubr.bf16.mxu0 0
    %954 = vmatmul.mubr.bf16.gmra.mrb[0].mxu0 %v776
    %v955 = vpop.f32.mrb[0].mxu0
    %v956 = vadd.f32 %v859, %v955
    %v957 = vpop.f32.mrb[0].mxu0
    %v958 = vpop.f32.mrb[0].mxu0
    %v959 = vadd.f32 %v862, %v958
    %v960 = vpop.f32.mrb[0].mxu0
    %961 = vmatprep.mubr.bf16.mxu0 0
    %962 = vmatmul.mubr.bf16.gmra.mrb[0].mxu0 %v779
    %v963 = vpop.f32.mrb[0].mxu0
    %v964 = vadd.f32 %v867, %v963
    %v965 = vpop.f32.mrb[0].mxu0
    %v966 = vpop.f32.mrb[0].mxu0
    %v967 = vadd.f32 %v870, %v966
    %v968 = vpop.f32.mrb[0].mxu0
    %969 = vmatprep.mubr.bf16.mxu0 0
    %970 = vmatmul.mubr.bf16.gmra.mrb[0].mxu0 %v782
    %v971 = vpop.f32.mrb[0].mxu0
    %v972 = vadd.f32 %v875, %v971
    %v973 = vpop.f32.mrb[0].mxu0
    %v974 = vpop.f32.mrb[0].mxu0
    %v975 = vadd.f32 %v878, %v974
    %v976 = vpop.f32.mrb[0].mxu0
    %977 = vdwg.mxu0
    %v978 = vsel %vm40, %v916, 0.0
    %v979 = vsel %vm40, %v919, 0.0
    %v980 = vadd.f32 %v978, %v979
    %v981 = vsel %vm40, %v924, 0.0
    %v982 = vadd.f32 %v980, %v981
    %v983 = vsel %vm40, %v927, 0.0
    %v984 = vadd.f32 %v982, %v983
    %v985 = vsel %vm40, %v932, 0.0
    %v986 = vadd.f32 %v984, %v985
    %v987 = vsel %vm40, %v935, 0.0
    %v988 = vadd.f32 %v986, %v987
    %v989 = vsel %vm40, %v940, 0.0
    %v990 = vadd.f32 %v988, %v989
    %v991 = vsel %vm40, %v943, 0.0
    %v992 = vadd.f32 %v990, %v991
    %v993 = vrot.slane %v992, 4
    %v994 = vadd.f32 %v992, %v993
    %v995 = vrot.slane %v994, 2
    %v996 = vadd.f32 %v994, %v995
    %v997 = vrot.slane %v996, 1
    %v998 = vadd.f32 %v996, %v997
    %v999 = vsel %vm40, %v948, 0.0
    %v1000 = vsel %vm40, %v951, 0.0
    %v1001 = vadd.f32 %v999, %v1000
    %v1002 = vsel %vm40, %v956, 0.0
    %v1003 = vadd.f32 %v1001, %v1002
    %v1004 = vsel %vm40, %v959, 0.0
    %v1005 = vadd.f32 %v1003, %v1004
    %v1006 = vsel %vm40, %v964, 0.0
    %v1007 = vadd.f32 %v1005, %v1006
    %v1008 = vsel %vm40, %v967, 0.0
    %v1009 = vadd.f32 %v1007, %v1008
    %v1010 = vsel %vm40, %v972, 0.0
    %v1011 = vadd.f32 %v1009, %v1010
    %v1012 = vsel %vm40, %v975, 0.0
    %v1013 = vadd.f32 %v1011, %v1012
    %v1014 = vrot.slane %v1013, 4
    %v1015 = vadd.f32 %v1013, %v1014
    %v1016 = vrot.slane %v1015, 2
    %v1017 = vadd.f32 %v1015, %v1016
    %v1018 = vrot.slane %v1017, 1
    %v1019 = vadd.f32 %v1017, %v1018
    %v1020 = vrcp.pop 64.0
    %v1021 = vmul.f32 %v998, %v1020
    %v1022 = vmul.f32 %v1019, %v1020
    %v1023 = vld [vmem:[%s2] sm:$0x3]
    %v1024 = vmul.f32 %v1021, %v1023
    %v1025 = vmul.f32 %v1022, %v1023
    %v1026 = vsel %vm42, %v1024, 0.0
    %1027 = vadd.xlane.f32.xlu0 %v1026
    %v1028 = vpop.xlane.xlu0 %1027
    %v1029 = vsel %vm42, %v1025, 0.0
    %1030 = vadd.xlane.f32.xlu0 %v1029
    %v1031 = vpop.xlane.xlu0 %1030
    %v1032 = vld [vmem:[%s3] sm:$0x1]
    %v1034 = vlaneseq
    %v1035 = vshrl.u32 %v1034, 7
    %v1036 = vsub.s32 0, %v1035
    %v1037 = vrot.slane %v1032, %v1036
    %1039 = vbcast.lane.b32.xlu0 %v1037, 256
    %v1040 = vpop.permute.xlu0 %1039
    %v1042 = vadd.f32 %v1028, %v1040
    %v1043 = vadd.f32 %v1031, %v1040
    %v1044 = vmax.f32 %v1042, 0.0
    %v1045 = vmax.f32 %v1043, 0.0
    %v1046 = vld [vmem:[%s4] sm:$0x3]
    %1048 = vset.pattern.permute.xlu0 0
    %1049 = vperm.xlu0 %1048, %v1044
    %v1050 = vpop.permute.xlu0 %1049
    %1053 = vset.pattern.permute.xlu0 0
    %1054 = vperm.xlu0 %1053, %v1045
    %v1055 = vpop.permute.xlu0 %1054
    %v1057 = vmul.f32 %v1050, %v1046
    %v1058 = vmul.f32 %v1055, %v1046
    %v1059 = vsel %vm42, %v1057, 0.0
    %v1060 = vrot.slane %v1059, 4
    %v1061 = vadd.f32 %v1059, %v1060
    %v1062 = vrot.slane %v1061, 2
    %v1063 = vadd.f32 %v1061, %v1062
    %v1064 = vrot.slane %v1063, 1
    %v1065 = vadd.f32 %v1063, %v1064
    %v1066 = vsel %vm42, %v1058, 0.0
    %v1067 = vrot.slane %v1066, 4
    %v1068 = vadd.f32 %v1066, %v1067
    %v1069 = vrot.slane %v1068, 2
    %v1070 = vadd.f32 %v1068, %v1069
    %v1071 = vrot.slane %v1070, 1
    %v1072 = vadd.f32 %v1070, %v1071
    %v1073 = vld [vmem:[%s5] sm:$0x1]
    %v1075 = vlaneseq
    %v1076 = vshrl.u32 %v1075, 7
    %v1077 = vsub.s32 0, %v1076
    %v1078 = vrot.slane %v1073, %v1077
    %v1080 = vadd.f32 %v1065, %v1078
    %v1081 = vadd.f32 %v1072, %v1078
    %v1082 = vxor.u32 %v1080, 2147483648
    %v1083 = vxor.u32 %v1081, 2147483648
    %v1084 = vmul.f32 %v1082, 1.442695
    %v1085 = vpow.pop %v1084
    %v1086 = vmul.f32 %v1083, 1.442695
    %v1087 = vpow.pop %v1086
    %v1088 = vadd.f32 %v1085, 1.0
    %v1089 = vadd.f32 %v1087, 1.0
    %v1090 = vrcp.pop %v1088
    %v1091 = vmul.f32 1.0, %v1090
    %v1092 = vrcp.pop %v1089
    %v1093 = vmul.f32 1.0, %v1092
    %v1094 = vlaneseq
    %v1095 = vshrl.u32 %v1094, 7
    %v1096 = vsub.s32 0, %v1095
    %v1097 = vrot.slane %v1091, %v1096
    %v1098 = vlaneseq
    %v1099 = vshrl.u32 %v1098, 7
    %v1100 = vsub.s32 0, %v1099
    %v1101 = vrot.slane %v1093, %v1100
    %v1102 = vmul.f32 %v916, %v1097
    %v1103 = vmul.f32 %v919, %v1097
    %v1104 = vmul.f32 %v924, %v1097
    %v1105 = vmul.f32 %v927, %v1097
    %v1106 = vmul.f32 %v932, %v1097
    %v1107 = vmul.f32 %v935, %v1097
    %v1108 = vmul.f32 %v940, %v1097
    %v1109 = vmul.f32 %v943, %v1097
    %v1110 = vmul.f32 %v948, %v1101
    %v1111 = vmul.f32 %v951, %v1101
    %v1112 = vmul.f32 %v956, %v1101
    %v1113 = vmul.f32 %v959, %v1101
    %v1114 = vmul.f32 %v964, %v1101
    %v1115 = vmul.f32 %v967, %v1101
    %v1116 = vmul.f32 %v972, %v1101
    %v1117 = vmul.f32 %v975, %v1101
    %v1118 = vld [vmem:[%s6] sm:$0x1]
    %v1119 = vld [vmem:[%s7] sm:$0x1]
    %v1120 = vsel %vm40, %v1102, 0.0
    %v1121 = vsel %vm40, %v1103, 0.0
    %v1122 = vadd.f32 %v1120, %v1121
    %v1123 = vsel %vm40, %v1104, 0.0
    %v1124 = vadd.f32 %v1122, %v1123
    %v1125 = vsel %vm40, %v1105, 0.0
    %v1126 = vadd.f32 %v1124, %v1125
    %v1127 = vsel %vm40, %v1106, 0.0
    %v1128 = vadd.f32 %v1126, %v1127
    %v1129 = vsel %vm40, %v1107, 0.0
    %v1130 = vadd.f32 %v1128, %v1129
    %v1131 = vsel %vm40, %v1108, 0.0
    %v1132 = vadd.f32 %v1130, %v1131
    %v1133 = vsel %vm40, %v1109, 0.0
    %v1134 = vadd.f32 %v1132, %v1133
    %v1135 = vsel %vm40, %v1110, 0.0
    %v1136 = vadd.f32 %v1134, %v1135
    %v1137 = vsel %vm40, %v1111, 0.0
    %v1138 = vadd.f32 %v1136, %v1137
    %v1139 = vsel %vm40, %v1112, 0.0
    %v1140 = vadd.f32 %v1138, %v1139
    %v1141 = vsel %vm40, %v1113, 0.0
    %v1142 = vadd.f32 %v1140, %v1141
    %v1143 = vsel %vm40, %v1114, 0.0
    %v1144 = vadd.f32 %v1142, %v1143
    %v1145 = vsel %vm40, %v1115, 0.0
    %v1146 = vadd.f32 %v1144, %v1145
    %v1147 = vsel %vm40, %v1116, 0.0
    %v1148 = vadd.f32 %v1146, %v1147
    %v1149 = vsel %vm40, %v1117, 0.0
    %v1150 = vadd.f32 %v1148, %v1149
    %v1151 = vrot.slane %v1150, 4
    %v1152 = vadd.f32 %v1150, %v1151
    %v1153 = vrot.slane %v1152, 2
    %v1154 = vadd.f32 %v1152, %v1153
    %v1155 = vrot.slane %v1154, 1
    %v1156 = vadd.f32 %v1154, %v1155
    %v1157 = vmul.f32 %v1156, 0.0078125
    %v1158 = vsub.f32 %v1102, %v1157
    %v1159 = vsub.f32 %v1103, %v1157
    %v1160 = vsub.f32 %v1104, %v1157
    %v1161 = vsub.f32 %v1105, %v1157
    %v1162 = vsub.f32 %v1106, %v1157
    %v1163 = vsub.f32 %v1107, %v1157
    %v1164 = vsub.f32 %v1108, %v1157
    %v1165 = vsub.f32 %v1109, %v1157
    %v1166 = vsub.f32 %v1110, %v1157
    %v1167 = vsub.f32 %v1111, %v1157
    %v1168 = vsub.f32 %v1112, %v1157
    %v1169 = vsub.f32 %v1113, %v1157
    %v1170 = vsub.f32 %v1114, %v1157
    %v1171 = vsub.f32 %v1115, %v1157
    %v1172 = vsub.f32 %v1116, %v1157
    %v1173 = vsub.f32 %v1117, %v1157
    %v1174 = vmul.f32 %v1158, %v1158
    %v1175 = vmul.f32 %v1159, %v1159
    %v1176 = vmul.f32 %v1160, %v1160
    %v1177 = vmul.f32 %v1161, %v1161
    %v1178 = vmul.f32 %v1162, %v1162
    %v1179 = vmul.f32 %v1163, %v1163
    %v1180 = vmul.f32 %v1164, %v1164
    %v1181 = vmul.f32 %v1165, %v1165
    %v1182 = vmul.f32 %v1166, %v1166
    %v1183 = vmul.f32 %v1167, %v1167
    %v1184 = vmul.f32 %v1168, %v1168
    %v1185 = vmul.f32 %v1169, %v1169
    %v1186 = vmul.f32 %v1170, %v1170
    %v1187 = vmul.f32 %v1171, %v1171
    %v1188 = vmul.f32 %v1172, %v1172
    %v1189 = vmul.f32 %v1173, %v1173
    %v1190 = vsel %vm40, %v1174, 0.0
    %v1191 = vsel %vm40, %v1175, 0.0
    %v1192 = vadd.f32 %v1190, %v1191
    %v1193 = vsel %vm40, %v1176, 0.0
    %v1194 = vadd.f32 %v1192, %v1193
    %v1195 = vsel %vm40, %v1177, 0.0
    %v1196 = vadd.f32 %v1194, %v1195
    %v1197 = vsel %vm40, %v1178, 0.0
    %v1198 = vadd.f32 %v1196, %v1197
    %v1199 = vsel %vm40, %v1179, 0.0
    %v1200 = vadd.f32 %v1198, %v1199
    %v1201 = vsel %vm40, %v1180, 0.0
    %v1202 = vadd.f32 %v1200, %v1201
    %v1203 = vsel %vm40, %v1181, 0.0
    %v1204 = vadd.f32 %v1202, %v1203
    %v1205 = vsel %vm40, %v1182, 0.0
    %v1206 = vadd.f32 %v1204, %v1205
    %v1207 = vsel %vm40, %v1183, 0.0
    %v1208 = vadd.f32 %v1206, %v1207
    %v1209 = vsel %vm40, %v1184, 0.0
    %v1210 = vadd.f32 %v1208, %v1209
    %v1211 = vsel %vm40, %v1185, 0.0
    %v1212 = vadd.f32 %v1210, %v1211
    %v1213 = vsel %vm40, %v1186, 0.0
    %v1214 = vadd.f32 %v1212, %v1213
    %v1215 = vsel %vm40, %v1187, 0.0
    %v1216 = vadd.f32 %v1214, %v1215
    %v1217 = vsel %vm40, %v1188, 0.0
    %v1218 = vadd.f32 %v1216, %v1217
    %v1219 = vsel %vm40, %v1189, 0.0
    %v1220 = vadd.f32 %v1218, %v1219
    %v1221 = vrot.slane %v1220, 4
    %v1222 = vadd.f32 %v1220, %v1221
    %v1223 = vrot.slane %v1222, 2
    %v1224 = vadd.f32 %v1222, %v1223
    %v1225 = vrot.slane %v1224, 1
    %v1226 = vadd.f32 %v1224, %v1225
    %v1227 = vmul.f32 %v1226, 0.0078125
    %v1228 = vadd.f32 %v1227, 1e-05
    %v1229 = vrsqrt.pop %v1228
    %v1230 = vmul.f32 %v1118, %v1229
    %v1232 = vlaneseq
    %v1233 = vshrl.u32 %v1232, 7
    %v1234 = vsub.s32 0, %v1233
    %v1235 = vrot.slane %v1230, %v1234
    %v1237 = vmul.f32 %v1158, %v1235
    %v1238 = vmul.f32 %v1159, %v1235
    %v1239 = vmul.f32 %v1160, %v1235
    %v1240 = vmul.f32 %v1161, %v1235
    %v1241 = vmul.f32 %v1162, %v1235
    %v1242 = vmul.f32 %v1163, %v1235
    %v1243 = vmul.f32 %v1164, %v1235
    %v1244 = vmul.f32 %v1165, %v1235
    %v1245 = vmul.f32 %v1166, %v1235
    %v1246 = vmul.f32 %v1167, %v1235
    %v1247 = vmul.f32 %v1168, %v1235
    %v1248 = vmul.f32 %v1169, %v1235
    %v1249 = vmul.f32 %v1170, %v1235
    %v1250 = vmul.f32 %v1171, %v1235
    %v1251 = vmul.f32 %v1172, %v1235
    %v1252 = vmul.f32 %v1173, %v1235
    %v1254 = vlaneseq
    %v1255 = vshrl.u32 %v1254, 7
    %v1256 = vsub.s32 0, %v1255
    %v1257 = vrot.slane %v1119, %v1256
    %v1259 = vadd.f32 %v1237, %v1257
    %v1260 = vadd.f32 %v1238, %v1257
    %v1261 = vadd.f32 %v1239, %v1257
    %v1262 = vadd.f32 %v1240, %v1257
    %v1263 = vadd.f32 %v1241, %v1257
    %v1264 = vadd.f32 %v1242, %v1257
    %v1265 = vadd.f32 %v1243, %v1257
    %v1266 = vadd.f32 %v1244, %v1257
    %v1267 = vadd.f32 %v1245, %v1257
    %v1268 = vadd.f32 %v1246, %v1257
    %v1269 = vadd.f32 %v1247, %v1257
    %v1270 = vadd.f32 %v1248, %v1257
    %v1271 = vadd.f32 %v1249, %v1257
    %v1272 = vadd.f32 %v1250, %v1257
    %v1273 = vadd.f32 %v1251, %v1257
    %v1274 = vadd.f32 %v1252, %v1257
    %v1275 = vmax.f32 %v1259, 0.0
    %v1276 = vmax.f32 %v1260, 0.0
    %v1277 = vmax.f32 %v1261, 0.0
    %v1278 = vmax.f32 %v1262, 0.0
    %v1279 = vmax.f32 %v1263, 0.0
    %v1280 = vmax.f32 %v1264, 0.0
    %v1281 = vmax.f32 %v1265, 0.0
    %v1282 = vmax.f32 %v1266, 0.0
    %v1283 = vmax.f32 %v1267, 0.0
    %v1284 = vmax.f32 %v1268, 0.0
    %v1285 = vmax.f32 %v1269, 0.0
    %v1286 = vmax.f32 %v1270, 0.0
    %v1287 = vmax.f32 %v1271, 0.0
    %v1288 = vmax.f32 %v1272, 0.0
    %v1289 = vmax.f32 %v1273, 0.0
    %v1290 = vmax.f32 %v1274, 0.0
    %1291 = vst.msk [vmem:[%s108 + $0x1] sm:$0xff] %vm40, %v1275
    %1292 = vst.msk [vmem:[%s108 + $0x11] sm:$0xff] %vm40, %v1276
    %1293 = vst.msk [vmem:[%s108 + $0x21] sm:$0xff] %vm40, %v1277
    %1294 = vst.msk [vmem:[%s108 + $0x31] sm:$0xff] %vm40, %v1278
    %1295 = vst.msk [vmem:[%s108 + $0x41] sm:$0xff] %vm40, %v1279
    %1296 = vst.msk [vmem:[%s108 + $0x51] sm:$0xff] %vm40, %v1280
    %1297 = vst.msk [vmem:[%s108 + $0x61] sm:$0xff] %vm40, %v1281
    %1298 = vst.msk [vmem:[%s108 + $0x71] sm:$0xff] %vm40, %v1282
    %1299 = vst.msk [vmem:[%s108 + $0xa1] sm:$0xff] %vm40, %v1283
    %1300 = vst.msk [vmem:[%s108 + $0xb1] sm:$0xff] %vm40, %v1284
    %1301 = vst.msk [vmem:[%s108 + $0xc1] sm:$0xff] %vm40, %v1285
    %1302 = vst.msk [vmem:[%s108 + $0xd1] sm:$0xff] %vm40, %v1286
    %1303 = vst.msk [vmem:[%s108 + $0xe1] sm:$0xff] %vm40, %v1287
    %1304 = vst.msk [vmem:[%s108 + $0xf1] sm:$0xff] %vm40, %v1288
    %1305 = vst.msk [vmem:[%s108 + $0x101] sm:$0xff] %vm40, %v1289
    %1306 = vst.msk [vmem:[%s108 + $0x111] sm:$0xff] %vm40, %v1290
    %v1307 = vld [vmem:[#allocation2] sm:$0xff]
    %v1308 = vld [vmem:[#allocation2 + $0x10] sm:$0xff]
    %v1309 = vld [vmem:[#allocation2 + $0x20] sm:$0xff]
    %v1310 = vld [vmem:[#allocation2 + $0x30] sm:$0xff]
    %v1311 = vld [vmem:[#allocation2 + $0x40] sm:$0xff]
    %v1312 = vld [vmem:[#allocation2 + $0x50] sm:$0xff]
    %v1313 = vld [vmem:[#allocation2 + $0x60] sm:$0xff]
    %v1314 = vld [vmem:[#allocation2 + $0x70] sm:$0xff]
    %v1315 = vld [vmem:[#allocation2 + $0xa0] sm:$0xff]
    %v1316 = vld [vmem:[#allocation2 + $0xb0] sm:$0xff]
    %v1317 = vld [vmem:[#allocation2 + $0xc0] sm:$0xff]
    %v1318 = vld [vmem:[#allocation2 + $0xd0] sm:$0xff]
    %v1319 = vld [vmem:[#allocation2 + $0xe0] sm:$0xff]
    %v1320 = vld [vmem:[#allocation2 + $0xf0] sm:$0xff]
    %v1321 = vld [vmem:[#allocation2 + $0x100] sm:$0xff]
    %v1322 = vld [vmem:[#allocation2 + $0x110] sm:$0xff]
    %v1323 = vpack.c.bf16 %v1308, %v1307
    %v1324 = vpack.c.bf16 %v1310, %v1309
    %v1325 = vpack.c.bf16 %v1312, %v1311
    %v1326 = vpack.c.bf16 %v1314, %v1313
    %v1327 = vpack.c.bf16 %v1316, %v1315
    %v1328 = vpack.c.bf16 %v1318, %v1317
    %v1329 = vpack.c.bf16 %v1320, %v1319
    %v1330 = vpack.c.bf16 %v1322, %v1321
    %v1331 = vld [vmem:[#allocation2 + $0x1] sm:$0xff]
    %v1332 = vld [vmem:[#allocation2 + $0x11] sm:$0xff]
    %v1333 = vld [vmem:[#allocation2 + $0x21] sm:$0xff]
    %v1334 = vld [vmem:[#allocation2 + $0x31] sm:$0xff]
    %v1335 = vld [vmem:[#allocation2 + $0x41] sm:$0xff]
    %v1336 = vld [vmem:[#allocation2 + $0x51] sm:$0xff]
    %v1337 = vld [vmem:[#allocation2 + $0x61] sm:$0xff]
    %v1338 = vld [vmem:[#allocation2 + $0x71] sm:$0xff]
    %v1339 = vld [vmem:[#allocation2 + $0xa1] sm:$0xff]
    %v1340 = vld [vmem:[#allocation2 + $0xb1] sm:$0xff]
    %v1341 = vld [vmem:[#allocation2 + $0xc1] sm:$0xff]
    %v1342 = vld [vmem:[#allocation2 + $0xd1] sm:$0xff]
    %v1343 = vld [vmem:[#allocation2 + $0xe1] sm:$0xff]
    %v1344 = vld [vmem:[#allocation2 + $0xf1] sm:$0xff]
    %v1345 = vld [vmem:[#allocation2 + $0x101] sm:$0xff]
    %v1346 = vld [vmem:[#allocation2 + $0x111] sm:$0xff]
    %v1347 = vpack.c.bf16 %v1332, %v1331
    %v1348 = vpack.c.bf16 %v1334, %v1333
    %v1349 = vpack.c.bf16 %v1336, %v1335
    %v1350 = vpack.c.bf16 %v1338, %v1337
    %v1351 = vpack.c.bf16 %v1340, %v1339
    %v1352 = vpack.c.bf16 %v1342, %v1341
    %v1353 = vpack.c.bf16 %v1344, %v1343
    %v1354 = vpack.c.bf16 %v1346, %v1345
    %v1355 = vld [vmem:[#allocation2 + $0x2] sm:$0xff]
    %v1356 = vld [vmem:[#allocation2 + $0x12] sm:$0xff]
    %v1357 = vld [vmem:[#allocation2 + $0x22] sm:$0xff]
    %v1358 = vld [vmem:[#allocation2 + $0x32] sm:$0xff]
    %v1359 = vld [vmem:[#allocation2 + $0x42] sm:$0xff]
    %v1360 = vld [vmem:[#allocation2 + $0x52] sm:$0xff]
    %v1361 = vld [vmem:[#allocation2 + $0x62] sm:$0xff]
    %v1362 = vld [vmem:[#allocation2 + $0x72] sm:$0xff]
    %v1363 = vld [vmem:[#allocation2 + $0xa2] sm:$0xff]
    %v1364 = vld [vmem:[#allocation2 + $0xb2] sm:$0xff]
    %v1365 = vld [vmem:[#allocation2 + $0xc2] sm:$0xff]
    %v1366 = vld [vmem:[#allocation2 + $0xd2] sm:$0xff]
    %v1367 = vld [vmem:[#allocation2 + $0xe2] sm:$0xff]
    %v1368 = vld [vmem:[#allocation2 + $0xf2] sm:$0xff]
    %v1369 = vld [vmem:[#allocation2 + $0x102] sm:$0xff]
    %v1370 = vld [vmem:[#allocation2 + $0x112] sm:$0xff]
    %v1371 = vpack.c.bf16 %v1356, %v1355
    %v1372 = vpack.c.bf16 %v1358, %v1357
    %v1373 = vpack.c.bf16 %v1360, %v1359
    %v1374 = vpack.c.bf16 %v1362, %v1361
    %v1375 = vpack.c.bf16 %v1364, %v1363
    %v1376 = vpack.c.bf16 %v1366, %v1365
    %v1377 = vpack.c.bf16 %v1368, %v1367
    %v1378 = vpack.c.bf16 %v1370, %v1369
    %v1379 = vld [vmem:[%s108] sm:$0xff]
    %v1380 = vld [vmem:[%s108 + $0x10] sm:$0xff]
    %v1381 = vld [vmem:[%s108 + $0x20] sm:$0xff]
    %v1382 = vld [vmem:[%s108 + $0x30] sm:$0xff]
    %v1383 = vld [vmem:[%s108 + $0x40] sm:$0xff]
    %v1384 = vld [vmem:[%s108 + $0x50] sm:$0xff]
    %v1385 = vld [vmem:[%s108 + $0x60] sm:$0xff]
    %v1386 = vld [vmem:[%s108 + $0x70] sm:$0xff]
    %v1387 = vld [vmem:[%s108 + $0xa0] sm:$0xff]
    %v1388 = vld [vmem:[%s108 + $0xb0] sm:$0xff]
    %v1389 = vld [vmem:[%s108 + $0xc0] sm:$0xff]
    %v1390 = vld [vmem:[%s108 + $0xd0] sm:$0xff]
    %v1391 = vld [vmem:[%s108 + $0xe0] sm:$0xff]
    %v1392 = vld [vmem:[%s108 + $0xf0] sm:$0xff]
    %v1393 = vld [vmem:[%s108 + $0x100] sm:$0xff]
    %v1394 = vld [vmem:[%s108 + $0x110] sm:$0xff]
    %v1395 = vpack.c.bf16 %v1380, %v1379
    %v1396 = vpack.c.bf16 %v1382, %v1381
    %v1397 = vpack.c.bf16 %v1384, %v1383
    %v1398 = vpack.c.bf16 %v1386, %v1385
    %v1399 = vpack.c.bf16 %v1388, %v1387
    %v1400 = vpack.c.bf16 %v1390, %v1389
    %v1401 = vpack.c.bf16 %v1392, %v1391
    %v1402 = vpack.c.bf16 %v1394, %v1393
    %v1403 = vld [vmem:[%s108 + $0x1] sm:$0xff]
    %v1404 = vld [vmem:[%s108 + $0x11] sm:$0xff]
    %v1405 = vld [vmem:[%s108 + $0x21] sm:$0xff]
    %v1406 = vld [vmem:[%s108 + $0x31] sm:$0xff]
    %v1407 = vld [vmem:[%s108 + $0x41] sm:$0xff]
    %v1408 = vld [vmem:[%s108 + $0x51] sm:$0xff]
    %v1409 = vld [vmem:[%s108 + $0x61] sm:$0xff]
    %v1410 = vld [vmem:[%s108 + $0x71] sm:$0xff]
    %v1411 = vld [vmem:[%s108 + $0xa1] sm:$0xff]
    %v1412 = vld [vmem:[%s108 + $0xb1] sm:$0xff]
    %v1413 = vld [vmem:[%s108 + $0xc1] sm:$0xff]
    %v1414 = vld [vmem:[%s108 + $0xd1] sm:$0xff]
    %v1415 = vld [vmem:[%s108 + $0xe1] sm:$0xff]
    %v1416 = vld [vmem:[%s108 + $0xf1] sm:$0xff]
    %v1417 = vld [vmem:[%s108 + $0x101] sm:$0xff]
    %v1418 = vld [vmem:[%s108 + $0x111] sm:$0xff]
    %v1419 = vpack.c.bf16 %v1404, %v1403
    %v1420 = vpack.c.bf16 %v1406, %v1405
    %v1421 = vpack.c.bf16 %v1408, %v1407
    %v1422 = vpack.c.bf16 %v1410, %v1409
    %v1423 = vpack.c.bf16 %v1412, %v1411
    %v1424 = vpack.c.bf16 %v1414, %v1413
    %v1425 = vpack.c.bf16 %v1416, %v1415
    %v1426 = vpack.c.bf16 %v1418, %v1417
    %v1427 = vld [vmem:[%s108 + $0x2] sm:$0xff]
    %v1428 = vld [vmem:[%s108 + $0x12] sm:$0xff]
    %v1429 = vld [vmem:[%s108 + $0x22] sm:$0xff]
    %v1430 = vld [vmem:[%s108 + $0x32] sm:$0xff]
    %v1431 = vld [vmem:[%s108 + $0x42] sm:$0xff]
    %v1432 = vld [vmem:[%s108 + $0x52] sm:$0xff]
    %v1433 = vld [vmem:[%s108 + $0x62] sm:$0xff]
    %v1434 = vld [vmem:[%s108 + $0x72] sm:$0xff]
    %v1435 = vld [vmem:[%s108 + $0xa2] sm:$0xff]
    %v1436 = vld [vmem:[%s108 + $0xb2] sm:$0xff]
    %v1437 = vld [vmem:[%s108 + $0xc2] sm:$0xff]
    %v1438 = vld [vmem:[%s108 + $0xd2] sm:$0xff]
    %v1439 = vld [vmem:[%s108 + $0xe2] sm:$0xff]
    %v1440 = vld [vmem:[%s108 + $0xf2] sm:$0xff]
    %v1441 = vld [vmem:[%s108 + $0x102] sm:$0xff]
    %v1442 = vld [vmem:[%s108 + $0x112] sm:$0xff]
    %v1443 = vpack.c.bf16 %v1428, %v1427
    %v1444 = vpack.c.bf16 %v1430, %v1429
    %v1445 = vpack.c.bf16 %v1432, %v1431
    %v1446 = vpack.c.bf16 %v1434, %v1433
    %v1447 = vpack.c.bf16 %v1436, %v1435
    %v1448 = vpack.c.bf16 %v1438, %v1437
    %v1449 = vpack.c.bf16 %v1440, %v1439
    %v1450 = vpack.c.bf16 %v1442, %v1441
    %v1451 = vld [vmem:[%s269] sm:$0xff]
    %v1452 = vld [vmem:[%s269 + $0x10] sm:$0xff]
    %v1453 = vld [vmem:[%s269 + $0x20] sm:$0xff]
    %v1454 = vld [vmem:[%s269 + $0x30] sm:$0xff]
    %v1455 = vld [vmem:[%s269 + $0x40] sm:$0xff]
    %v1456 = vld [vmem:[%s269 + $0x50] sm:$0xff]
    %v1457 = vld [vmem:[%s269 + $0x60] sm:$0xff]
    %v1458 = vld [vmem:[%s269 + $0x70] sm:$0xff]
    %v1459 = vld [vmem:[%s269 + $0xa0] sm:$0xff]
    %v1460 = vld [vmem:[%s269 + $0xb0] sm:$0xff]
    %v1461 = vld [vmem:[%s269 + $0xc0] sm:$0xff]
    %v1462 = vld [vmem:[%s269 + $0xd0] sm:$0xff]
    %v1463 = vld [vmem:[%s269 + $0xe0] sm:$0xff]
    %v1464 = vld [vmem:[%s269 + $0xf0] sm:$0xff]
    %v1465 = vld [vmem:[%s269 + $0x100] sm:$0xff]
    %v1466 = vld [vmem:[%s269 + $0x110] sm:$0xff]
    %v1467 = vpack.c.bf16 %v1452, %v1451
    %v1468 = vpack.c.bf16 %v1454, %v1453
    %v1469 = vpack.c.bf16 %v1456, %v1455
    %v1470 = vpack.c.bf16 %v1458, %v1457
    %v1471 = vpack.c.bf16 %v1460, %v1459
    %v1472 = vpack.c.bf16 %v1462, %v1461
    %v1473 = vpack.c.bf16 %v1464, %v1463
    %v1474 = vpack.c.bf16 %v1466, %v1465
    %v1475 = vld [vmem:[%s269 + $0x1] sm:$0xff]
    %v1476 = vld [vmem:[%s269 + $0x11] sm:$0xff]
    %v1477 = vld [vmem:[%s269 + $0x21] sm:$0xff]
    %v1478 = vld [vmem:[%s269 + $0x31] sm:$0xff]
    %v1479 = vld [vmem:[%s269 + $0x41] sm:$0xff]
    %v1480 = vld [vmem:[%s269 + $0x51] sm:$0xff]
    %v1481 = vld [vmem:[%s269 + $0x61] sm:$0xff]
    %v1482 = vld [vmem:[%s269 + $0x71] sm:$0xff]
    %v1483 = vld [vmem:[%s269 + $0xa1] sm:$0xff]
    %v1484 = vld [vmem:[%s269 + $0xb1] sm:$0xff]
    %v1485 = vld [vmem:[%s269 + $0xc1] sm:$0xff]
    %v1486 = vld [vmem:[%s269 + $0xd1] sm:$0xff]
    %v1487 = vld [vmem:[%s269 + $0xe1] sm:$0xff]
    %v1488 = vld [vmem:[%s269 + $0xf1] sm:$0xff]
    %v1489 = vld [vmem:[%s269 + $0x101] sm:$0xff]
    %v1490 = vld [vmem:[%s269 + $0x111] sm:$0xff]
    %v1491 = vpack.c.bf16 %v1476, %v1475
    %v1492 = vpack.c.bf16 %v1478, %v1477
    %v1493 = vpack.c.bf16 %v1480, %v1479
    %v1494 = vpack.c.bf16 %v1482, %v1481
    %v1495 = vpack.c.bf16 %v1484, %v1483
    %v1496 = vpack.c.bf16 %v1486, %v1485
    %v1497 = vpack.c.bf16 %v1488, %v1487
    %v1498 = vpack.c.bf16 %v1490, %v1489
    %v1499 = vld [vmem:[%s269 + $0x2] sm:$0xff]
    %v1500 = vld [vmem:[%s269 + $0x12] sm:$0xff]
    %v1501 = vld [vmem:[%s269 + $0x22] sm:$0xff]
    %v1502 = vld [vmem:[%s269 + $0x32] sm:$0xff]
    %v1503 = vld [vmem:[%s269 + $0x42] sm:$0xff]
    %v1504 = vld [vmem:[%s269 + $0x52] sm:$0xff]
    %v1505 = vld [vmem:[%s269 + $0x62] sm:$0xff]
    %v1506 = vld [vmem:[%s269 + $0x72] sm:$0xff]
    %v1507 = vld [vmem:[%s269 + $0xa2] sm:$0xff]
    %v1508 = vld [vmem:[%s269 + $0xb2] sm:$0xff]
    %v1509 = vld [vmem:[%s269 + $0xc2] sm:$0xff]
    %v1510 = vld [vmem:[%s269 + $0xd2] sm:$0xff]
    %v1511 = vld [vmem:[%s269 + $0xe2] sm:$0xff]
    %v1512 = vld [vmem:[%s269 + $0xf2] sm:$0xff]
    %v1513 = vld [vmem:[%s269 + $0x102] sm:$0xff]
    %v1514 = vld [vmem:[%s269 + $0x112] sm:$0xff]
    %v1515 = vpack.c.bf16 %v1500, %v1499
    %v1516 = vpack.c.bf16 %v1502, %v1501
    %v1517 = vpack.c.bf16 %v1504, %v1503
    %v1518 = vpack.c.bf16 %v1506, %v1505
    %v1519 = vpack.c.bf16 %v1508, %v1507
    %v1520 = vpack.c.bf16 %v1510, %v1509
    %v1521 = vpack.c.bf16 %v1512, %v1511
    %v1522 = vpack.c.bf16 %v1514, %v1513
    %1531 = vrot.lane.b32.xlu0 %v1347, 32
    %v1532 = vpop.permute.xlu0 %1531
    %1533 = vrot.lane.b32.xlu0 %v1348, 32
    %v1534 = vpop.permute.xlu0 %1533
    %1535 = vrot.lane.b32.xlu0 %v1349, 32
    %v1536 = vpop.permute.xlu0 %1535
    %1537 = vrot.lane.b32.xlu0 %v1350, 32
    %v1538 = vpop.permute.xlu0 %1537
    %1539 = vrot.lane.b32.xlu0 %v1351, 32
    %v1540 = vpop.permute.xlu0 %1539
    %1541 = vrot.lane.b32.xlu0 %v1352, 32
    %v1542 = vpop.permute.xlu0 %1541
    %1543 = vrot.lane.b32.xlu0 %v1353, 32
    %v1544 = vpop.permute.xlu0 %1543
    %1545 = vrot.lane.b32.xlu0 %v1354, 32
    %v1546 = vpop.permute.xlu0 %1545
    %1555 = vrot.lane.b32.xlu0 %v1371, 64
    %v1556 = vpop.permute.xlu0 %1555
    %1557 = vrot.lane.b32.xlu0 %v1372, 64
    %v1558 = vpop.permute.xlu0 %1557
    %1559 = vrot.lane.b32.xlu0 %v1373, 64
    %v1560 = vpop.permute.xlu0 %1559
    %1561 = vrot.lane.b32.xlu0 %v1374, 64
    %v1562 = vpop.permute.xlu0 %1561
    %1563 = vrot.lane.b32.xlu0 %v1375, 64
    %v1564 = vpop.permute.xlu0 %1563
    %1565 = vrot.lane.b32.xlu0 %v1376, 64
    %v1566 = vpop.permute.xlu0 %1565
    %1567 = vrot.lane.b32.xlu0 %v1377, 64
    %v1568 = vpop.permute.xlu0 %1567
    %1569 = vrot.lane.b32.xlu0 %v1378, 64
    %v1570 = vpop.permute.xlu0 %1569
    %1579 = vrot.lane.b32.xlu0 %v1395, 96
    %v1580 = vpop.permute.xlu0 %1579
    %1581 = vrot.lane.b32.xlu0 %v1396, 96
    %v1582 = vpop.permute.xlu0 %1581
    %1583 = vrot.lane.b32.xlu0 %v1397, 96
    %v1584 = vpop.permute.xlu0 %1583
    %1585 = vrot.lane.b32.xlu0 %v1398, 96
    %v1586 = vpop.permute.xlu0 %1585
    %1587 = vrot.lane.b32.xlu0 %v1399, 96
    %v1588 = vpop.permute.xlu0 %1587
    %1589 = vrot.lane.b32.xlu0 %v1400, 96
    %v1590 = vpop.permute.xlu0 %1589
    %1591 = vrot.lane.b32.xlu0 %v1401, 96
    %v1592 = vpop.permute.xlu0 %1591
    %1593 = vrot.lane.b32.xlu0 %v1402, 96
    %v1594 = vpop.permute.xlu0 %1593
    %1603 = vrot.lane.b32.xlu0 %v1443, 32
    %v1604 = vpop.permute.xlu0 %1603
    %1605 = vrot.lane.b32.xlu0 %v1444, 32
    %v1606 = vpop.permute.xlu0 %1605
    %1607 = vrot.lane.b32.xlu0 %v1445, 32
    %v1608 = vpop.permute.xlu0 %1607
    %1609 = vrot.lane.b32.xlu0 %v1446, 32
    %v1610 = vpop.permute.xlu0 %1609
    %1611 = vrot.lane.b32.xlu0 %v1447, 32
    %v1612 = vpop.permute.xlu0 %1611
    %1613 = vrot.lane.b32.xlu0 %v1448, 32
    %v1614 = vpop.permute.xlu0 %1613
    %1615 = vrot.lane.b32.xlu0 %v1449, 32
    %v1616 = vpop.permute.xlu0 %1615
    %1617 = vrot.lane.b32.xlu0 %v1450, 32
    %v1618 = vpop.permute.xlu0 %1617
    %1627 = vrot.lane.b32.xlu0 %v1467, 64
    %v1628 = vpop.permute.xlu0 %1627
    %1629 = vrot.lane.b32.xlu0 %v1468, 64
    %v1630 = vpop.permute.xlu0 %1629
    %1631 = vrot.lane.b32.xlu0 %v1469, 64
    %v1632 = vpop.permute.xlu0 %1631
    %1633 = vrot.lane.b32.xlu0 %v1470, 64
    %v1634 = vpop.permute.xlu0 %1633
    %1635 = vrot.lane.b32.xlu0 %v1471, 64
    %v1636 = vpop.permute.xlu0 %1635
    %1637 = vrot.lane.b32.xlu0 %v1472, 64
    %v1638 = vpop.permute.xlu0 %1637
    %1639 = vrot.lane.b32.xlu0 %v1473, 64
    %v1640 = vpop.permute.xlu0 %1639
    %1641 = vrot.lane.b32.xlu0 %v1474, 64
    %v1642 = vpop.permute.xlu0 %1641
    %1651 = vrot.lane.b32.xlu0 %v1491, 96
    %v1652 = vpop.permute.xlu0 %1651
    %1653 = vrot.lane.b32.xlu0 %v1492, 96
    %v1654 = vpop.permute.xlu0 %1653
    %1655 = vrot.lane.b32.xlu0 %v1493, 96
    %v1656 = vpop.permute.xlu0 %1655
    %1657 = vrot.lane.b32.xlu0 %v1494, 96
    %v1658 = vpop.permute.xlu0 %1657
    %1659 = vrot.lane.b32.xlu0 %v1495, 96
    %v1660 = vpop.permute.xlu0 %1659
    %1661 = vrot.lane.b32.xlu0 %v1496, 96
    %v1662 = vpop.permute.xlu0 %1661
    %1663 = vrot.lane.b32.xlu0 %v1497, 96
    %v1664 = vpop.permute.xlu0 %1663
    %1665 = vrot.lane.b32.xlu0 %v1498, 96
    %v1666 = vpop.permute.xlu0 %1665
    %v1669 = vsel %vm40, %v1323, %v1532
    %v1672 = vsel %vm40, %v1324, %v1534
    %v1675 = vsel %vm40, %v1325, %v1536
    %v1678 = vsel %vm40, %v1326, %v1538
    %v1681 = vsel %vm40, %v1327, %v1540
    %v1684 = vsel %vm40, %v1328, %v1542
    %v1687 = vsel %vm40, %v1329, %v1544
    %v1690 = vsel %vm40, %v1330, %v1546
    %v1692 = vsel %vm510, %v1669, %v1556
    %v1694 = vsel %vm510, %v1672, %v1558
    %v1696 = vsel %vm510, %v1675, %v1560
    %v1698 = vsel %vm510, %v1678, %v1562
    %v1700 = vsel %vm510, %v1681, %v1564
    %v1702 = vsel %vm510, %v1684, %v1566
    %v1704 = vsel %vm510, %v1687, %v1568
    %v1706 = vsel %vm510, %v1690, %v1570
    %v1708 = vsel %vm527, %v1692, %v1580
    %v1711 = vsel %vm527, %v1694, %v1582
    %v1714 = vsel %vm527, %v1696, %v1584
    %v1717 = vsel %vm527, %v1698, %v1586
    %v1720 = vsel %vm527, %v1700, %v1588
    %v1723 = vsel %vm527, %v1702, %v1590
    %v1726 = vsel %vm527, %v1704, %v1592
    %v1729 = vsel %vm527, %v1706, %v1594
    %v1733 = vsel %vm40, %v1419, %v1604
    %v1736 = vsel %vm40, %v1420, %v1606
    %v1739 = vsel %vm40, %v1421, %v1608
    %v1742 = vsel %vm40, %v1422, %v1610
    %v1745 = vsel %vm40, %v1423, %v1612
    %v1748 = vsel %vm40, %v1424, %v1614
    %v1751 = vsel %vm40, %v1425, %v1616
    %v1754 = vsel %vm40, %v1426, %v1618
    %v1756 = vsel %vm510, %v1733, %v1628
    %v1758 = vsel %vm510, %v1736, %v1630
    %v1760 = vsel %vm510, %v1739, %v1632
    %v1762 = vsel %vm510, %v1742, %v1634
    %v1764 = vsel %vm510, %v1745, %v1636
    %v1766 = vsel %vm510, %v1748, %v1638
    %v1768 = vsel %vm510, %v1751, %v1640
    %v1770 = vsel %vm510, %v1754, %v1642
    %v1772 = vsel %vm527, %v1756, %v1652
    %v1775 = vsel %vm527, %v1758, %v1654
    %v1778 = vsel %vm527, %v1760, %v1656
    %v1781 = vsel %vm527, %v1762, %v1658
    %v1784 = vsel %vm527, %v1764, %v1660
    %v1787 = vsel %vm527, %v1766, %v1662
    %v1790 = vsel %vm527, %v1768, %v1664
    %v1793 = vsel %vm527, %v1770, %v1666
    %v1795 = vld [vmem:[%s8] sm:$0xf]
    %v1796 = vld [vmem:[%s8 + $0x4] sm:$0xf]
    %v1797 = vld [vmem:[%s8 + $0x8] sm:$0xf]
    %v1798 = vld [vmem:[%s8 + $0xc] sm:$0xf]
    %v1799 = vld [vmem:[%s8 + $0x10] sm:$0xf]
    %v1800 = vld [vmem:[%s8 + $0x14] sm:$0xf]
    %v1801 = vld [vmem:[%s8 + $0x18] sm:$0xf]
    %v1802 = vld [vmem:[%s8 + $0x1c] sm:$0xf]
    %v1803 = vld [vmem:[%s8 + $0x20] sm:$0xf]
    %v1804 = vld [vmem:[%s8 + $0x24] sm:$0xf]
    %v1805 = vld [vmem:[%s8 + $0x28] sm:$0xf]
    %v1806 = vld [vmem:[%s8 + $0x2c] sm:$0xf]
    %v1807 = vld [vmem:[%s8 + $0x30] sm:$0xf]
    %v1808 = vld [vmem:[%s8 + $0x34] sm:$0xf]
    %v1809 = vld [vmem:[%s8 + $0x38] sm:$0xf]
    %v1810 = vld [vmem:[%s8 + $0x3c] sm:$0xf]
    %v1811 = vld [vmem:[%s8 + $0x40] sm:$0xf]
    %v1812 = vld [vmem:[%s8 + $0x44] sm:$0xf]
    %v1813 = vld [vmem:[%s8 + $0x48] sm:$0xf]
    %v1814 = vld [vmem:[%s8 + $0x4c] sm:$0xf]
    %v1815 = vld [vmem:[%s8 + $0x50] sm:$0xf]
    %v1816 = vld [vmem:[%s8 + $0x54] sm:$0xf]
    %v1817 = vld [vmem:[%s8 + $0x58] sm:$0xf]
    %v1818 = vld [vmem:[%s8 + $0x5c] sm:$0xf]
    %v1819 = vld [vmem:[%s8 + $0x60] sm:$0xf]
    %v1820 = vld [vmem:[%s8 + $0x64] sm:$0xf]
    %v1821 = vld [vmem:[%s8 + $0x68] sm:$0xf]
    %v1822 = vld [vmem:[%s8 + $0x6c] sm:$0xf]
    %v1823 = vld [vmem:[%s8 + $0x70] sm:$0xf]
    %v1824 = vld [vmem:[%s8 + $0x74] sm:$0xf]
    %v1825 = vld [vmem:[%s8 + $0x78] sm:$0xf]
    %v1826 = vld [vmem:[%s8 + $0x7c] sm:$0xf]
    %v1827 = vld [vmem:[%s8 + $0x80] sm:$0xf]
    %v1828 = vld [vmem:[%s8 + $0x84] sm:$0xf]
    %v1829 = vld [vmem:[%s8 + $0x88] sm:$0xf]
    %v1830 = vld [vmem:[%s8 + $0x8c] sm:$0xf]
    %v1867 = vunpack.c.l.b16 %v1795
    %v1868 = vunpack.c.l.b16 %v1796
    %v1869 = vunpack.c.l.b16 %v1797
    %v1870 = vunpack.c.l.b16 %v1798
    %v1871 = vunpack.c.l.b16 %v1799
    %v1872 = vunpack.c.l.b16 %v1800
    %v1873 = vunpack.c.l.b16 %v1801
    %v1874 = vunpack.c.l.b16 %v1802
    %v1875 = vunpack.c.l.b16 %v1803
    %v1876 = vunpack.c.l.b16 %v1804
    %v1877 = vunpack.c.l.b16 %v1805
    %v1878 = vunpack.c.l.b16 %v1806
    %v1879 = vunpack.c.l.b16 %v1807
    %v1880 = vunpack.c.l.b16 %v1808
    %v1881 = vunpack.c.l.b16 %v1809
    %v1882 = vunpack.c.l.b16 %v1810
    %v1883 = vunpack.c.l.b16 %v1811
    %v1884 = vunpack.c.l.b16 %v1812
    %v1885 = vunpack.c.l.b16 %v1813
    %v1886 = vunpack.c.l.b16 %v1814
    %v1887 = vunpack.c.l.b16 %v1815
    %v1888 = vunpack.c.l.b16 %v1816
    %v1889 = vunpack.c.l.b16 %v1817
    %v1890 = vunpack.c.l.b16 %v1818
    %v1891 = vunpack.c.l.b16 %v1819
    %v1892 = vunpack.c.l.b16 %v1820
    %v1893 = vunpack.c.l.b16 %v1821
    %v1894 = vunpack.c.l.b16 %v1822
    %v1895 = vunpack.c.l.b16 %v1823
    %v1896 = vunpack.c.l.b16 %v1824
    %v1897 = vunpack.c.l.b16 %v1825
    %v1898 = vunpack.c.l.b16 %v1826
    %v1899 = vunpack.c.l.b16 %v1827
    %v1900 = vunpack.c.l.b16 %v1828
    %v1901 = vunpack.c.l.b16 %v1829
    %v1902 = vunpack.c.l.b16 %v1830
    %v1903 = vpack.c.b16 %v1868, %v1867
    %v1904 = vpack.c.b16 %v1870, %v1869
    %v1905 = vpack.c.b16 %v1872, %v1871
    %v1906 = vpack.c.b16 %v1874, %v1873
    %v1907 = vpack.c.b16 %v1876, %v1875
    %v1908 = vpack.c.b16 %v1878, %v1877
    %v1909 = vpack.c.b16 %v1880, %v1879
    %v1910 = vpack.c.b16 %v1882, %v1881
    %v1911 = vpack.c.b16 %v1884, %v1883
    %v1912 = vpack.c.b16 %v1886, %v1885
    %v1913 = vpack.c.b16 %v1888, %v1887
    %v1914 = vpack.c.b16 %v1890, %v1889
    %v1915 = vpack.c.b16 %v1892, %v1891
    %v1916 = vpack.c.b16 %v1894, %v1893
    %v1917 = vpack.c.b16 %v1896, %v1895
    %v1918 = vpack.c.b16 %v1898, %v1897
    %v1919 = vpack.c.b16 %v1900, %v1899
    %v1920 = vpack.c.b16 %v1902, %v1901
    %v1940 = vsel %vm40, %v1515, 0
    %v1943 = vsel %vm40, %v1516, 0
    %v1946 = vsel %vm40, %v1517, 0
    %v1949 = vsel %vm40, %v1518, 0
    %v1952 = vsel %vm40, %v1519, 0
    %v1955 = vsel %vm40, %v1520, 0
    %v1958 = vsel %vm40, %v1521, 0
    %v1961 = vsel %vm40, %v1522, 0
    %1963 = vmatprep.subr.bf16.mxu0 0
    %1964 = vmatpush1.bf16.msra.mxu0 %v1903
    %1965 = vmatprep.subr.bf16.mxu0 0
    %1966 = vmatpush1.bf16.msra.mxu0 %v1904
    %1967 = vmatprep.subr.bf16.mxu0 0
    %1968 = vmatpush1.bf16.msra.mxu0 %v1905
    %1969 = vmatprep.subr.bf16.mxu0 0
    %1970 = vmatpush1.bf16.msra.mxu0 %v1906
    %1971 = vmatprep.subr.bf16.mxu0 0
    %1972 = vmatpush1.bf16.msra.mxu0 %v1907
    %1973 = vmatprep.subr.bf16.mxu0 0
    %1974 = vmatpush1.bf16.msra.mxu0 %v1908
    %1975 = vmatprep.subr.bf16.mxu0 0
    %1976 = vmatpush1.bf16.msra.mxu0 %v1909
    %1977 = vmatprep.subr.bf16.mxu0 0
    %1978 = vmatpush1.bf16.msra.mxu0 %v1910
    %1979 = vmatprep.subr.bf16.mxu0 0
    %1980 = vmatpush1.bf16.msra.mxu0 %v1911
    %1981 = vmatprep.subr.bf16.mxu0 0
    %1982 = vmatpush1.bf16.msra.mxu0 %v1912
    %1983 = vmatprep.subr.bf16.mxu0 0
    %1984 = vmatpush1.bf16.msra.mxu0 %v1913
    %1985 = vmatprep.subr.bf16.mxu0 0
    %1986 = vmatpush1.bf16.msra.mxu0 %v1914
    %1987 = vmatprep.subr.bf16.mxu0 0
    %1988 = vmatpush1.bf16.msra.mxu0 %v1915
    %1989 = vmatprep.subr.bf16.mxu0 0
    %1990 = vmatpush1.bf16.msra.mxu0 %v1916
    %1991 = vmatprep.subr.bf16.mxu0 0
    %1992 = vmatpush1.bf16.msra.mxu0 %v1917
    %1993 = vmatprep.subr.bf16.mxu0 0
    %1994 = vmatpush1.bf16.msra.mxu0 %v1918
    %1995 = vmatprep.mubr.bf16.mxu0 %v1772
    %1996 = vmatmul.mubr.bf16.gmra.mrb[0].mxu0 %v1708
    %v1997 = vpop.f32.mrb[0].mxu0
    %v1998 = vadd.f32 0.0, %v1997
    %v1999 = vpop.f32.mrb[0].mxu0
    %v2000 = vpop.f32.mrb[0].mxu0
    %v2001 = vadd.f32 0.0, %v2000
    %v2002 = vpop.f32.mrb[0].mxu0
    %2003 = vmatprep.mubr.bf16.mxu0 %v1775
    %2004 = vmatmul.mubr.bf16.gmra.mrb[0].mxu0 %v1711
    %v2005 = vpop.f32.mrb[0].mxu0
    %v2006 = vadd.f32 0.0, %v2005
    %v2007 = vpop.f32.mrb[0].mxu0
    %v2008 = vpop.f32.mrb[0].mxu0
    %v2009 = vadd.f32 0.0, %v2008
    %v2010 = vpop.f32.mrb[0].mxu0
    %2011 = vmatprep.mubr.bf16.mxu0 %v1778
    %2012 = vmatmul.mubr.bf16.gmra.mrb[0].mxu0 %v1714
    %v2013 = vpop.f32.mrb[0].mxu0
    %v2014 = vadd.f32 0.0, %v2013
    %v2015 = vpop.f32.mrb[0].mxu0
    %v2016 = vpop.f32.mrb[0].mxu0
    %v2017 = vadd.f32 0.0, %v2016
    %v2018 = vpop.f32.mrb[0].mxu0
    %2019 = vmatprep.mubr.bf16.mxu0 %v1781
    %2020 = vmatmul.mubr.bf16.gmra.mrb[0].mxu0 %v1717
    %v2021 = vpop.f32.mrb[0].mxu0
    %v2022 = vadd.f32 0.0, %v2021
    %v2023 = vpop.f32.mrb[0].mxu0
    %v2024 = vpop.f32.mrb[0].mxu0
    %v2025 = vadd.f32 0.0, %v2024
    %v2026 = vpop.f32.mrb[0].mxu0
    %2027 = vmatprep.mubr.bf16.mxu0 %v1784
    %2028 = vmatmul.mubr.bf16.gmra.mrb[0].mxu0 %v1720
    %v2029 = vpop.f32.mrb[0].mxu0
    %v2030 = vadd.f32 0.0, %v2029
    %v2031 = vpop.f32.mrb[0].mxu0
    %v2032 = vpop.f32.mrb[0].mxu0
    %v2033 = vadd.f32 0.0, %v2032
    %v2034 = vpop.f32.mrb[0].mxu0
    %2035 = vmatprep.mubr.bf16.mxu0 %v1787
    %2036 = vmatmul.mubr.bf16.gmra.mrb[0].mxu0 %v1723
    %v2037 = vpop.f32.mrb[0].mxu0
    %v2038 = vadd.f32 0.0, %v2037
    %v2039 = vpop.f32.mrb[0].mxu0
    %v2040 = vpop.f32.mrb[0].mxu0
    %v2041 = vadd.f32 0.0, %v2040
    %v2042 = vpop.f32.mrb[0].mxu0
    %2043 = vmatprep.mubr.bf16.mxu0 %v1790
    %2044 = vmatmul.mubr.bf16.gmra.mrb[0].mxu0 %v1726
    %v2045 = vpop.f32.mrb[0].mxu0
    %v2046 = vadd.f32 0.0, %v2045
    %v2047 = vpop.f32.mrb[0].mxu0
    %v2048 = vpop.f32.mrb[0].mxu0
    %v2049 = vadd.f32 0.0, %v2048
    %v2050 = vpop.f32.mrb[0].mxu0
    %2051 = vmatprep.mubr.bf16.mxu0 %v1793
    %2052 = vmatmul.mubr.bf16.gmra.mrb[0].mxu0 %v1729
    %v2053 = vpop.f32.mrb[0].mxu0
    %v2054 = vadd.f32 0.0, %v2053
    %v2055 = vpop.f32.mrb[0].mxu0
    %v2056 = vpop.f32.mrb[0].mxu0
    %v2057 = vadd.f32 0.0, %v2056
    %v2058 = vpop.f32.mrb[0].mxu0
    %2059 = vdwg.mxu0
    %2060 = vmatprep.subr.bf16.mxu0 0
    %2061 = vmatpush1.bf16.msra.mxu0 %v1919
    %2062 = vmatprep.subr.bf16.mxu0 0
    %2063 = vmatpush1.bf16.msra.mxu0 %v1920
    %2064 = vmatprep.subr.bf16.mxu0 0
    %2065 = vmatpush1.bf16.msra.mxu0 0
    %2066 = vmatprep.subr.bf16.mxu0 0
    %2067 = vmatpush1.bf16.msra.mxu0 0
    %2068 = vmatprep.subr.bf16.mxu0 0
    %2069 = vmatpush1.bf16.msra.mxu0 0
    %2070 = vmatprep.subr.bf16.mxu0 0
    %2071 = vmatpush1.bf16.msra.mxu0 0
    %2072 = vmatprep.subr.bf16.mxu0 0
    %2073 = vmatpush1.bf16.msra.mxu0 0
    %2074 = vmatprep.subr.bf16.mxu0 0
    %2075 = vmatpush1.bf16.msra.mxu0 0
    %2076 = vmatprep.subr.bf16.mxu0 0
    %2077 = vmatpush1.bf16.msra.mxu0 0
    %2078 = vmatprep.subr.bf16.mxu0 0
    %2079 = vmatpush1.bf16.msra.mxu0 0
    %2080 = vmatprep.subr.bf16.mxu0 0
    %2081 = vmatpush1.bf16.msra.mxu0 0
    %2082 = vmatprep.subr.bf16.mxu0 0
    %2083 = vmatpush1.bf16.msra.mxu0 0
    %2084 = vmatprep.subr.bf16.mxu0 0
    %2085 = vmatpush1.bf16.msra.mxu0 0
    %2086 = vmatprep.subr.bf16.mxu0 0
    %2087 = vmatpush1.bf16.msra.mxu0 0
    %2088 = vmatprep.subr.bf16.mxu0 0
    %2089 = vmatpush1.bf16.msra.mxu0 0
    %2090 = vmatprep.subr.bf16.mxu0 0
    %2091 = vmatpush1.bf16.msra.mxu0 0
    %2092 = vmatprep.mubr.bf16.mxu0 0
    %2093 = vmatmul.mubr.bf16.gmra.mrb[0].mxu0 %v1940
    %v2094 = vpop.f32.mrb[0].mxu0
    %v2095 = vadd.f32 %v1998, %v2094
    %v2096 = vpop.f32.mrb[0].mxu0
    %v2097 = vpop.f32.mrb[0].mxu0
    %v2098 = vadd.f32 %v2001, %v2097
    %v2099 = vpop.f32.mrb[0].mxu0
    %2100 = vmatprep.mubr.bf16.mxu0 0
    %2101 = vmatmul.mubr.bf16.gmra.mrb[0].mxu0 %v1943
    %v2102 = vpop.f32.mrb[0].mxu0
    %v2103 = vadd.f32 %v2006, %v2102
    %v2104 = vpop.f32.mrb[0].mxu0
    %v2105 = vpop.f32.mrb[0].mxu0
    %v2106 = vadd.f32 %v2009, %v2105
    %v2107 = vpop.f32.mrb[0].mxu0
    %2108 = vmatprep.mubr.bf16.mxu0 0
    %2109 = vmatmul.mubr.bf16.gmra.mrb[0].mxu0 %v1946
    %v2110 = vpop.f32.mrb[0].mxu0
    %v2111 = vadd.f32 %v2014, %v2110
    %v2112 = vpop.f32.mrb[0].mxu0
    %v2113 = vpop.f32.mrb[0].mxu0
    %v2114 = vadd.f32 %v2017, %v2113
    %v2115 = vpop.f32.mrb[0].mxu0
    %2116 = vmatprep.mubr.bf16.mxu0 0
    %2117 = vmatmul.mubr.bf16.gmra.mrb[0].mxu0 %v1949
    %v2118 = vpop.f32.mrb[0].mxu0
    %v2119 = vadd.f32 %v2022, %v2118
    %v2120 = vpop.f32.mrb[0].mxu0
    %v2121 = vpop.f32.mrb[0].mxu0
    %v2122 = vadd.f32 %v2025, %v2121
    %v2123 = vpop.f32.mrb[0].mxu0
    %2124 = vmatprep.mubr.bf16.mxu0 0
    %2125 = vmatmul.mubr.bf16.gmra.mrb[0].mxu0 %v1952
    %v2126 = vpop.f32.mrb[0].mxu0
    %v2127 = vadd.f32 %v2030, %v2126
    %v2128 = vpop.f32.mrb[0].mxu0
    %v2129 = vpop.f32.mrb[0].mxu0
    %v2130 = vadd.f32 %v2033, %v2129
    %v2131 = vpop.f32.mrb[0].mxu0
    %2132 = vmatprep.mubr.bf16.mxu0 0
    %2133 = vmatmul.mubr.bf16.gmra.mrb[0].mxu0 %v1955
    %v2134 = vpop.f32.mrb[0].mxu0
    %v2135 = vadd.f32 %v2038, %v2134
    %v2136 = vpop.f32.mrb[0].mxu0
    %v2137 = vpop.f32.mrb[0].mxu0
    %v2138 = vadd.f32 %v2041, %v2137
    %v2139 = vpop.f32.mrb[0].mxu0
    %2140 = vmatprep.mubr.bf16.mxu0 0
    %2141 = vmatmul.mubr.bf16.gmra.mrb[0].mxu0 %v1958
    %v2142 = vpop.f32.mrb[0].mxu0
    %v2143 = vadd.f32 %v2046, %v2142
    %v2144 = vpop.f32.mrb[0].mxu0
    %v2145 = vpop.f32.mrb[0].mxu0
    %v2146 = vadd.f32 %v2049, %v2145
    %v2147 = vpop.f32.mrb[0].mxu0
    %2148 = vmatprep.mubr.bf16.mxu0 0
    %2149 = vmatmul.mubr.bf16.gmra.mrb[0].mxu0 %v1961
    %v2150 = vpop.f32.mrb[0].mxu0
    %v2151 = vadd.f32 %v2054, %v2150
    %v2152 = vpop.f32.mrb[0].mxu0
    %v2153 = vpop.f32.mrb[0].mxu0
    %v2154 = vadd.f32 %v2057, %v2153
    %v2155 = vpop.f32.mrb[0].mxu0
    %2156 = vdwg.mxu0
    %v2157 = vld [vmem:[%s9] sm:$0x1]
    %v2158 = vld [vmem:[%s10] sm:$0x1]
    %v2159 = vsel %vm40, %v2095, 0.0
    %v2160 = vsel %vm40, %v2098, 0.0
    %v2161 = vadd.f32 %v2159, %v2160
    %v2162 = vsel %vm40, %v2103, 0.0
    %v2163 = vadd.f32 %v2161, %v2162
    %v2164 = vsel %vm40, %v2106, 0.0
    %v2165 = vadd.f32 %v2163, %v2164
    %v2166 = vsel %vm40, %v2111, 0.0
    %v2167 = vadd.f32 %v2165, %v2166
    %v2168 = vsel %vm40, %v2114, 0.0
    %v2169 = vadd.f32 %v2167, %v2168
    %v2170 = vsel %vm40, %v2119, 0.0
    %v2171 = vadd.f32 %v2169, %v2170
    %v2172 = vsel %vm40, %v2122, 0.0
    %v2173 = vadd.f32 %v2171, %v2172
    %v2174 = vsel %vm40, %v2127, 0.0
    %v2175 = vadd.f32 %v2173, %v2174
    %v2176 = vsel %vm40, %v2130, 0.0
    %v2177 = vadd.f32 %v2175, %v2176
    %v2178 = vsel %vm40, %v2135, 0.0
    %v2179 = vadd.f32 %v2177, %v2178
    %v2180 = vsel %vm40, %v2138, 0.0
    %v2181 = vadd.f32 %v2179, %v2180
    %v2182 = vsel %vm40, %v2143, 0.0
    %v2183 = vadd.f32 %v2181, %v2182
    %v2184 = vsel %vm40, %v2146, 0.0
    %v2185 = vadd.f32 %v2183, %v2184
    %v2186 = vsel %vm40, %v2151, 0.0
    %v2187 = vadd.f32 %v2185, %v2186
    %v2188 = vsel %vm40, %v2154, 0.0
    %v2189 = vadd.f32 %v2187, %v2188
    %v2190 = vrot.slane %v2189, 4
    %v2191 = vadd.f32 %v2189, %v2190
    %v2192 = vrot.slane %v2191, 2
    %v2193 = vadd.f32 %v2191, %v2192
    %v2194 = vrot.slane %v2193, 1
    %v2195 = vadd.f32 %v2193, %v2194
    %v2196 = vmul.f32 %v2195, 0.0078125
    %v2197 = vsub.f32 %v2095, %v2196
    %v2198 = vsub.f32 %v2098, %v2196
    %v2199 = vsub.f32 %v2103, %v2196
    %v2200 = vsub.f32 %v2106, %v2196
    %v2201 = vsub.f32 %v2111, %v2196
    %v2202 = vsub.f32 %v2114, %v2196
    %v2203 = vsub.f32 %v2119, %v2196
    %v2204 = vsub.f32 %v2122, %v2196
    %v2205 = vsub.f32 %v2127, %v2196
    %v2206 = vsub.f32 %v2130, %v2196
    %v2207 = vsub.f32 %v2135, %v2196
    %v2208 = vsub.f32 %v2138, %v2196
    %v2209 = vsub.f32 %v2143, %v2196
    %v2210 = vsub.f32 %v2146, %v2196
    %v2211 = vsub.f32 %v2151, %v2196
    %v2212 = vsub.f32 %v2154, %v2196
    %v2213 = vmul.f32 %v2197, %v2197
    %v2214 = vmul.f32 %v2198, %v2198
    %v2215 = vmul.f32 %v2199, %v2199
    %v2216 = vmul.f32 %v2200, %v2200
    %v2217 = vmul.f32 %v2201, %v2201
    %v2218 = vmul.f32 %v2202, %v2202
    %v2219 = vmul.f32 %v2203, %v2203
    %v2220 = vmul.f32 %v2204, %v2204
    %v2221 = vmul.f32 %v2205, %v2205
    %v2222 = vmul.f32 %v2206, %v2206
    %v2223 = vmul.f32 %v2207, %v2207
    %v2224 = vmul.f32 %v2208, %v2208
    %v2225 = vmul.f32 %v2209, %v2209
    %v2226 = vmul.f32 %v2210, %v2210
    %v2227 = vmul.f32 %v2211, %v2211
    %v2228 = vmul.f32 %v2212, %v2212
    %v2229 = vsel %vm40, %v2213, 0.0
    %v2230 = vsel %vm40, %v2214, 0.0
    %v2231 = vadd.f32 %v2229, %v2230
    %v2232 = vsel %vm40, %v2215, 0.0
    %v2233 = vadd.f32 %v2231, %v2232
    %v2234 = vsel %vm40, %v2216, 0.0
    %v2235 = vadd.f32 %v2233, %v2234
    %v2236 = vsel %vm40, %v2217, 0.0
    %v2237 = vadd.f32 %v2235, %v2236
    %v2238 = vsel %vm40, %v2218, 0.0
    %v2239 = vadd.f32 %v2237, %v2238
    %v2240 = vsel %vm40, %v2219, 0.0
    %v2241 = vadd.f32 %v2239, %v2240
    %v2242 = vsel %vm40, %v2220, 0.0
    %v2243 = vadd.f32 %v2241, %v2242
    %v2244 = vsel %vm40, %v2221, 0.0
    %v2245 = vadd.f32 %v2243, %v2244
    %v2246 = vsel %vm40, %v2222, 0.0
    %v2247 = vadd.f32 %v2245, %v2246
    %v2248 = vsel %vm40, %v2223, 0.0
    %v2249 = vadd.f32 %v2247, %v2248
    %v2250 = vsel %vm40, %v2224, 0.0
    %v2251 = vadd.f32 %v2249, %v2250
    %v2252 = vsel %vm40, %v2225, 0.0
    %v2253 = vadd.f32 %v2251, %v2252
    %v2254 = vsel %vm40, %v2226, 0.0
    %v2255 = vadd.f32 %v2253, %v2254
    %v2256 = vsel %vm40, %v2227, 0.0
    %v2257 = vadd.f32 %v2255, %v2256
    %v2258 = vsel %vm40, %v2228, 0.0
    %v2259 = vadd.f32 %v2257, %v2258
    %v2260 = vrot.slane %v2259, 4
    %v2261 = vadd.f32 %v2259, %v2260
    %v2262 = vrot.slane %v2261, 2
    %v2263 = vadd.f32 %v2261, %v2262
    %v2264 = vrot.slane %v2263, 1
    %v2265 = vadd.f32 %v2263, %v2264
    %v2266 = vmul.f32 %v2265, 0.0078125
    %v2267 = vadd.f32 %v2266, 1e-05
    %v2268 = vrsqrt.pop %v2267
    %v2269 = vmul.f32 %v2157, %v2268
    %v2271 = vlaneseq
    %v2272 = vshrl.u32 %v2271, 7
    %v2273 = vsub.s32 0, %v2272
    %v2274 = vrot.slane %v2269, %v2273
    %v2276 = vmul.f32 %v2197, %v2274
    %v2277 = vmul.f32 %v2198, %v2274
    %v2278 = vmul.f32 %v2199, %v2274
    %v2279 = vmul.f32 %v2200, %v2274
    %v2280 = vmul.f32 %v2201, %v2274
    %v2281 = vmul.f32 %v2202, %v2274
    %v2282 = vmul.f32 %v2203, %v2274
    %v2283 = vmul.f32 %v2204, %v2274
    %v2284 = vmul.f32 %v2205, %v2274
    %v2285 = vmul.f32 %v2206, %v2274
    %v2286 = vmul.f32 %v2207, %v2274
    %v2287 = vmul.f32 %v2208, %v2274
    %v2288 = vmul.f32 %v2209, %v2274
    %v2289 = vmul.f32 %v2210, %v2274
    %v2290 = vmul.f32 %v2211, %v2274
    %v2291 = vmul.f32 %v2212, %v2274
    %v2293 = vlaneseq
    %v2294 = vshrl.u32 %v2293, 7
    %v2295 = vsub.s32 0, %v2294
    %v2296 = vrot.slane %v2158, %v2295
    %v2298 = vadd.f32 %v2276, %v2296
    %v2299 = vadd.f32 %v2277, %v2296
    %v2300 = vadd.f32 %v2278, %v2296
    %v2301 = vadd.f32 %v2279, %v2296
    %v2302 = vadd.f32 %v2280, %v2296
    %v2303 = vadd.f32 %v2281, %v2296
    %v2304 = vadd.f32 %v2282, %v2296
    %v2305 = vadd.f32 %v2283, %v2296
    %v2306 = vadd.f32 %v2284, %v2296
    %v2307 = vadd.f32 %v2285, %v2296
    %v2308 = vadd.f32 %v2286, %v2296
    %v2309 = vadd.f32 %v2287, %v2296
    %v2310 = vadd.f32 %v2288, %v2296
    %v2311 = vadd.f32 %v2289, %v2296
    %v2312 = vadd.f32 %v2290, %v2296
    %v2313 = vadd.f32 %v2291, %v2296
    %v2314 = vld [vmem:[%s0] sm:$0xff]
    %v2315 = vld [vmem:[%s0 + $0x8] sm:$0xff]
    %v2316 = vld [vmem:[%s0 + $0x10] sm:$0xff]
    %v2317 = vld [vmem:[%s0 + $0x18] sm:$0xff]
    %v2318 = vld [vmem:[%s0 + $0x20] sm:$0xff]
    %v2319 = vld [vmem:[%s0 + $0x28] sm:$0xff]
    %v2320 = vld [vmem:[%s0 + $0x30] sm:$0xff]
    %v2321 = vld [vmem:[%s0 + $0x38] sm:$0xff]
    %v2322 = vld [vmem:[%s0 + $0x40] sm:$0xff]
    %v2323 = vld [vmem:[%s0 + $0x48] sm:$0xff]
    %v2324 = vld [vmem:[%s0 + $0x50] sm:$0xff]
    %v2325 = vld [vmem:[%s0 + $0x58] sm:$0xff]
    %v2326 = vld [vmem:[%s0 + $0x60] sm:$0xff]
    %v2327 = vld [vmem:[%s0 + $0x68] sm:$0xff]
    %v2328 = vld [vmem:[%s0 + $0x70] sm:$0xff]
    %v2329 = vld [vmem:[%s0 + $0x78] sm:$0xff]
    %v2330 = vadd.f32 %v2298, %v2314
    %v2331 = vadd.f32 %v2299, %v2315
    %v2332 = vadd.f32 %v2300, %v2316
    %v2333 = vadd.f32 %v2301, %v2317
    %v2334 = vadd.f32 %v2302, %v2318
    %v2335 = vadd.f32 %v2303, %v2319
    %v2336 = vadd.f32 %v2304, %v2320
    %v2337 = vadd.f32 %v2305, %v2321
    %v2338 = vadd.f32 %v2306, %v2322
    %v2339 = vadd.f32 %v2307, %v2323
    %v2340 = vadd.f32 %v2308, %v2324
    %v2341 = vadd.f32 %v2309, %v2325
    %v2342 = vadd.f32 %v2310, %v2326
    %v2343 = vadd.f32 %v2311, %v2327
    %v2344 = vadd.f32 %v2312, %v2328
    %v2345 = vadd.f32 %v2313, %v2329
    %v2346 = vmax.f32 %v2330, 0.0
    %v2347 = vmax.f32 %v2331, 0.0
    %v2348 = vmax.f32 %v2332, 0.0
    %v2349 = vmax.f32 %v2333, 0.0
    %v2350 = vmax.f32 %v2334, 0.0
    %v2351 = vmax.f32 %v2335, 0.0
    %v2352 = vmax.f32 %v2336, 0.0
    %v2353 = vmax.f32 %v2337, 0.0
    %v2354 = vmax.f32 %v2338, 0.0
    %v2355 = vmax.f32 %v2339, 0.0
    %v2356 = vmax.f32 %v2340, 0.0
    %v2357 = vmax.f32 %v2341, 0.0
    %v2358 = vmax.f32 %v2342, 0.0
    %v2359 = vmax.f32 %v2343, 0.0
    %v2360 = vmax.f32 %v2344, 0.0
    %v2361 = vmax.f32 %v2345, 0.0
    %2362 = vst.msk [vmem:[#allocation3] sm:$0xff] %vm40, %v2346
    %2363 = vst.msk [vmem:[#allocation3 + $0x8] sm:$0xff] %vm40, %v2347
    %2364 = vst.msk [vmem:[#allocation3 + $0x10] sm:$0xff] %vm40, %v2348
    %2365 = vst.msk [vmem:[#allocation3 + $0x18] sm:$0xff] %vm40, %v2349
    %2366 = vst.msk [vmem:[#allocation3 + $0x20] sm:$0xff] %vm40, %v2350
    %2367 = vst.msk [vmem:[#allocation3 + $0x28] sm:$0xff] %vm40, %v2351
    %2368 = vst.msk [vmem:[#allocation3 + $0x30] sm:$0xff] %vm40, %v2352
    %2369 = vst.msk [vmem:[#allocation3 + $0x38] sm:$0xff] %vm40, %v2353
    %2370 = vst.msk [vmem:[#allocation3 + $0x40] sm:$0xff] %vm40, %v2354
    %2371 = vst.msk [vmem:[#allocation3 + $0x48] sm:$0xff] %vm40, %v2355
    %2372 = vst.msk [vmem:[#allocation3 + $0x50] sm:$0xff] %vm40, %v2356
    %2373 = vst.msk [vmem:[#allocation3 + $0x58] sm:$0xff] %vm40, %v2357
    %2374 = vst.msk [vmem:[#allocation3 + $0x60] sm:$0xff] %vm40, %v2358
    %2375 = vst.msk [vmem:[#allocation3 + $0x68] sm:$0xff] %vm40, %v2359
    %2376 = vst.msk [vmem:[#allocation3 + $0x70] sm:$0xff] %vm40, %v2360
    %2377 = vst.msk [vmem:[#allocation3 + $0x78] sm:$0xff] %vm40, %v2361
    // Predicated region
    $region46: #{tpu_custom_call.1} parent=1 // pred_check
      _
    $region47: #{tpu_custom_call.1} parent=1 // pred_check_branch
      %2379 = sbr.rel (0) target = $region49
    $region48: #{tpu_custom_call.1} parent=1 // pred_region
      %s2381 = ssub.s32 2048, 2048
      %2382 = vsyncadd [#allocation4], %s2381
      %s2383 = sshll.u32 [#allocation3], 4
      %s2384 = int_to_ptr.vmem [resolvable:$true] %s2383
      %2389 = dma.vmem_to_hbm [thread:$0]  %s2384, 2048, %s11, [#allocation4], 128, 128, 8
    $region49: #{tpu_custom_call.1} parent=1 // pred_fallthru
      _
    // Predicated region
    $region50: #{tpu_custom_call.1} parent=1 // pred_check
      _
    $region51: #{tpu_custom_call.1} parent=1 // pred_check_branch
      %2391 = sbr.rel (0) target = $region53
    $region52: #{tpu_custom_call.1} parent=1 // pred_region
      %2392 = dma.done [#allocation4], 2048
    $region53: #{tpu_custom_call.1} parent=1 // pred_fallthru
      _
    %2393 = vsyncpa [#allocation4], 1

</llo_original>
